<compile_context>
chip_gen: v5e
topology: v5e:2x2
jax: 0.10.0
libtpu: 0.0.40
codegen_flags: <defaults>
</compile_context>

<pallas_src>
import functools

import jax
import jax.numpy as jnp
from jax import lax
from jax.experimental import pallas as pl
from jax.experimental.pallas import tpu as pltpu

EPS = 1e-5

# bf16 MXU inputs with f32 accumulation (~2x MXU throughput on v6e/v7x; element-wise
# math stays f32, which also suits v5e's f32-only VPU). Set to jnp.float32 for
# bit-tighter accuracy.
MATMUL_DTYPE = jnp.bfloat16
# Two-pass fallback stores the depthwise-conv output in HBM at this dtype.
DW_STORE_DTYPE = jnp.bfloat16
# Use the fused single-pallas_call path while the resident depthwise-output scratch
# fits comfortably in VMEM (conservative for v7x's 64 MiB VMEM, accounting for the
# double-buffered x/out blocks and resident weights).
FUSED_DW_VMEM_BUDGET_BYTES = 8 << 20


def _pick_block_batch(B, T, target_m=256):
    """Largest divisor of B such that the matmul M dimension (bB*T) reaches ~target_m.

    Batching batch slices per grid step raises MXU utilization and amortizes the
    ~0.35us per-grid-step overhead (M>=256 fills the v6e/v7x MXU; >=128 on v5e).
    """
    want = max(1, -(-target_m // T))
    for cand in range(min(B, want), 0, -1):
        if B % cand == 0:
            return cand
    return 1


# --------------------------------------------------------------------------- helpers
def _ln_glu_depthwise(x3, pad_ref, ln_w, ln_b, w0a, b0a, w0b, b0b, wdw, bdw, *, K,
                      matmul_dtype):
    """LayerNorm -> pointwise conv0 (split GLU halves) -> GLU -> depthwise conv.

    x3: (bB, T, C) f32.  pad_ref: (bB, T+K-1, C) f32 VMEM scratch.  Returns (bB, T, C) f32.
    """
    bB, T, C = x3.shape
    pad_left = (K - 1) // 2
    x = x3.reshape(bB * T, C)

    # LayerNorm over the channel (lane) axis.
    mean = jnp.mean(x, axis=-1, keepdims=True)
    var = jnp.mean((x - mean) ** 2, axis=-1, keepdims=True)
    y = (x - mean) * lax.rsqrt(var + EPS)
    y = y * ln_w + ln_b

    # pointwise_conv0 as two (C, C) MXU matmuls + GLU (splitting the (C, 2C) weight
    # kills the (M, 2C) intermediate and the non-lane-aligned channel slice at C).
    ym = y.astype(matmul_dtype)
    a = jnp.dot(ym, w0a.astype(matmul_dtype), preferred_element_type=jnp.float32) + b0a
    gate = jnp.dot(ym, w0b.astype(matmul_dtype), preferred_element_type=jnp.float32) + b0b
    glu = (a * jax.nn.sigmoid(gate)).reshape(bB, T, C)

    # Depthwise conv along T via a zero-padded VMEM scratch: each tap is a plain
    # sublane-offset slice (vector-load slots) — no pltpu.roll / compares / selects.
    if pad_left > 0:
        pad_ref[:, 0:pad_left, :] = jnp.zeros((bB, pad_left, C), jnp.float32)
    if K - 1 - pad_left > 0:
        pad_ref[:, pad_left + T:, :] = jnp.zeros((bB, K - 1 - pad_left, C), jnp.float32)
    pad_ref[:, pad_left:pad_left + T, :] = glu

    acc = jnp.zeros((bB, T, C), jnp.float32)
    # Static unroll over taps (K is compile-time). For very large K a
    # lax.fori_loop(..., unroll=True) over pl.ds taps bounds per-tap live ranges.
    for k in range(K):
        acc = acc + wdw[k] * pad_ref[:, k:k + T, :]
    return acc + bdw


def _bn_silu_pw1(dw3, bn_scale, bn_shift, w1, b1, *, matmul_dtype):
    """Folded BatchNorm -> SiLU -> pointwise conv1.  dw3: (bB, T, C) f32 -> (bB, T, C) f32."""
    bB, T, C = dw3.shape
    h = dw3.reshape(bB * T, C) * bn_scale + bn_shift
    s = h * jax.nn.sigmoid(h)                                  # SiLU
    o = jnp.dot(s.astype(matmul_dtype), w1.astype(matmul_dtype),
                preferred_element_type=jnp.float32) + b1
    return o.reshape(bB, T, C)


# --------------------------------------------------------------------------- kernels
def _fused_kernel(x_ref, ln_w_ref, ln_b_ref, w0a_ref, b0a_ref, w0b_ref, b0b_ref,
                  wdw_ref, bdw_ref, bn_g_ref, bn_b_ref, w1_ref, b1_ref,
                  out_ref, pad_ref, dw_ref, stats_ref, bnfold_ref,
                  *, K, bB, n_total, matmul_dtype):
    """Single-call path. grid = (phase, batch-block); dw stays resident in VMEM."""
    phase = pl.program_id(0)
    b = pl.program_id(1)
    start = pl.multiple_of(b * bB, bB)

    @pl.when(phase == 0)
    def _():
        @pl.when(b == 0)
        def _():
            stats_ref[...] = jnp.zeros_like(stats_ref)

        dw3 = _ln_glu_depthwise(
            x_ref[...], pad_ref, ln_w_ref[0], ln_b_ref[0],
            w0a_ref[...], b0a_ref[0], w0b_ref[...], b0b_ref[0],
            wdw_ref[...], bdw_ref[0], K=K, matmul_dtype=matmul_dtype)
        dw_ref[pl.ds(start, bB)] = dw3

        # BatchNorm partial sums (training-mode batch statistics).
        # TODO(synk): E[x^2]-E[x]^2 in f32 is cancellation-prone when |mean| >> std;
        # switch to a two-pass / Welford reduction if tolerances tighten.
        dw2 = dw3.reshape(-1, dw3.shape[-1])
        stats_ref[0:1, :] = stats_ref[0:1, :] + jnp.sum(dw2, axis=0, keepdims=True)
        stats_ref[1:2, :] = stats_ref[1:2, :] + jnp.sum(dw2 * dw2, axis=0, keepdims=True)

    @pl.when(phase == 1)
    def _():
        @pl.when(b == 0)
        def _():
            # Fold the batch statistics into a per-channel scale/shift, once.
            mean = stats_ref[0:1, :] * (1.0 / n_total)
            var = jnp.maximum(stats_ref[1:2, :] * (1.0 / n_total) - mean * mean, 0.0)
            inv = lax.rsqrt(var + EPS)
            gamma = bn_g_ref[0:1, :]
            bnfold_ref[0:1, :] = gamma * inv
            bnfold_ref[1:2, :] = bn_b_ref[0:1, :] - mean * gamma * inv

        dw3 = dw_ref[pl.ds(start, bB)]
        o = _bn_silu_pw1(dw3, bnfold_ref[0:1, :], bnfold_ref[1:2, :],
                         w1_ref[...], b1_ref[0:1, :], matmul_dtype=matmul_dtype)
        out_ref[...] = x_ref[...] + o                          # dropout p=0 == identity


def _pass1_kernel(x_ref, ln_w_ref, ln_b_ref, w0a_ref, b0a_ref, w0b_ref, b0b_ref,
                  wdw_ref, bdw_ref, dw_ref, stats_ref, pad_ref, *, K, matmul_dtype):
    """Two-pass fallback, pass 1: LN -> GLU pointwise -> depthwise, BN partial sums."""
    dw3 = _ln_glu_depthwise(
        x_ref[...], pad_ref, ln_w_ref[0], ln_b_ref[0],
        w0a_ref[...], b0a_ref[0], w0b_ref[...], b0b_ref[0],
        wdw_ref[...], bdw_ref[0], K=K, matmul_dtype=matmul_dtype)
    dw_ref[...] = dw3.astype(dw_ref.dtype)        # bf16 store: half the HBM round trip
    dw2 = dw3.reshape(-1, dw3.shape[-1])
    stats_ref[0:1, :] = jnp.sum(dw2, axis=0, keepdims=True)
    stats_ref[1:2, :] = jnp.sum(dw2 * dw2, axis=0, keepdims=True)


def _pass2_kernel(x_ref, dw_ref, bn_scale_ref, bn_shift_ref, w1_ref, b1_ref, out_ref,
                  *, matmul_dtype):
    """Two-pass fallback, pass 2: folded BN -> SiLU -> pointwise conv1 -> residual."""
    dw3 = dw_ref[...].astype(jnp.float32)
    o = _bn_silu_pw1(dw3, bn_scale_ref[0:1, :], bn_shift_ref[0:1, :],
                     w1_ref[...], b1_ref[0:1, :], matmul_dtype=matmul_dtype)
    out_ref[...] = x_ref[...] + o


# --------------------------------------------------------------------------- wrapper
@functools.partial(jax.jit, static_argnames=("kernel_size", "fuse"))
def conv_module_forward(x, params, *, kernel_size, fuse=None):
    B, T, C = x.shape
    K = kernel_size
    if fuse is None:
        fuse = (B * T * C * 4) <= FUSED_DW_VMEM_BUDGET_BYTES

    bB = _pick_block_batch(B, T)
    NB = B // bB

    # Split pointwise_conv0 into its two GLU halves; narrow the matmul weights once
    # outside the kernel (halves their VMEM/DMA footprint when bf16).
    w0a = params['w0'][:, :C].astype(MATMUL_DTYPE)
    w0b = params['w0'][:, C:].astype(MATMUL_DTYPE)
    b0a = params['b0'][:, :C]
    b0b = params['b0'][:, C:]
    w1 = params['w1'].astype(MATMUL_DTYPE)

    # TODO(synk): C is not padded to a multiple of 128 lanes here, so small C incurs
    # masked (vst.msk) output stores; pad C for lane-dense stores at widths % 128 != 0.
    # TODO(synk): constant-parameter specs could be single-buffered (pipeline_mode=
    # pl.Buffered(1)) to shave VMEM on v7x; for very long T add a T-tile grid axis
    # with a K-1 halo instead of whole-T blocks.

    if fuse:
        # ---- fused single pallas_call: phase 0 (LN+GLU+depthwise, BN partials),
        # ---- phase 1 (BN fold + SiLU + pointwise1 + residual). dw never hits HBM.
        x_spec = pl.BlockSpec((bB, T, C), lambda p, b: (b, 0, 0))
        # During phase 0 the output block index is pinned to 0 and never written by
        # the kernel, so no garbage block is written back to HBM; phase 1 then writes
        # every output block exactly once.
        out_spec = pl.BlockSpec((bB, T, C), lambda p, b: (b * p, 0, 0))

        def cspec(shape):
            return pl.BlockSpec(shape, lambda p, b: (0,) * len(shape))

        return pl.pallas_call(
            functools.partial(_fused_kernel, K=K, bB=bB, n_total=B * T,
                              matmul_dtype=MATMUL_DTYPE),
            grid=(2, NB),
            in_specs=[x_spec,
                      cspec((1, C)), cspec((1, C)),
                      cspec((C, C)), cspec((1, C)),
                      cspec((C, C)), cspec((1, C)),
                      cspec((K, C)), cspec((1, C)),
                      cspec((1, C)), cspec((1, C)),
                      cspec((C, C)), cspec((1, C))],
            out_specs=out_spec,
            out_shape=jax.ShapeDtypeStruct((B, T, C), x.dtype),
            scratch_shapes=[pltpu.VMEM((bB, T + K - 1, C), jnp.float32),  # padded GLU
                            pltpu.VMEM((B, T, C), jnp.float32),           # resident dw
                            pltpu.VMEM((2, C), jnp.float32),              # BN partials
                            pltpu.VMEM((2, C), jnp.float32)],             # folded BN
            compiler_params=pltpu.CompilerParams(
                dimension_semantics=("arbitrary", "arbitrary")),
        )(x, params['ln_w'], params['ln_b'], w0a, b0a, w0b, b0b,
          params['w_dw'], params['b_dw'], params['bn_g'], params['bn_b'],
          w1, params['b1'])

    # ---- two-pass fallback: bf16 depthwise-output round trip through HBM ----------
    x_spec = pl.BlockSpec((bB, T, C), lambda b: (b, 0, 0))
    stats_spec = pl.BlockSpec((None, 2, C), lambda b: (b, 0, 0))

    def cspec(shape):
        return pl.BlockSpec(shape, lambda b: (0,) * len(shape))

    cparams = pltpu.CompilerParams(dimension_semantics=("parallel",))

    dw, stats = pl.pallas_call(
        functools.partial(_pass1_kernel, K=K, matmul_dtype=MATMUL_DTYPE),
        grid=(NB,),
        in_specs=[x_spec,
                  cspec((1, C)), cspec((1, C)),
                  cspec((C, C)), cspec((1, C)),
                  cspec((C, C)), cspec((1, C)),
                  cspec((K, C)), cspec((1, C))],
        out_specs=(x_spec, stats_spec),
        out_shape=(jax.ShapeDtypeStruct((B, T, C), DW_STORE_DTYPE),
                   jax.ShapeDtypeStruct((NB, 2, C), jnp.float32)),
        scratch_shapes=[pltpu.VMEM((bB, T + K - 1, C), jnp.float32)],
        compiler_params=cparams,
    )(x, params['ln_w'], params['ln_b'], w0a, b0a, w0b, b0b,
      params['w_dw'], params['b_dw'])

    # BatchNorm batch statistics (training mode, biased variance) folded into one
    # per-channel scale/shift. (B*T > 1, so the PyTorch BN branch is always taken;
    # running-stat updates do not affect the output.)
    n = B * T
    ssum = jnp.sum(stats[:, 0, :], axis=0)
    ssq = jnp.sum(stats[:, 1, :], axis=0)
    bmean = ssum / n
    bvar = jnp.maximum(ssq / n - bmean * bmean, 0.0)
    inv = lax.rsqrt(bvar + EPS)
    gamma = params['bn_g'][0]
    beta = params['bn_b'][0]
    bn_scale = (gamma * inv)[None, :]
    bn_shift = (beta - bmean * gamma * inv)[None, :]

    # NOTE: the former input_output_aliases={1: 0} (reuse the dw HBM buffer for the
    # output) is dropped: dw is bf16 now, so the byte sizes no longer match.
    return pl.pallas_call(
        functools.partial(_pass2_kernel, matmul_dtype=MATMUL_DTYPE),
        grid=(NB,),
        in_specs=[x_spec, x_spec,
                  cspec((1, C)), cspec((1, C)),
                  cspec((C, C)), cspec((1, C))],
        out_specs=x_spec,
        out_shape=jax.ShapeDtypeStruct((B, T, C), x.dtype),
        compiler_params=cparams,
    )(x, dw, bn_scale, bn_shift, w1, params['b1'])


# --------------------------------------------------------------------- reference/init
def reference_forward(x, p, kernel_size, matmul_dtype=jnp.float32,
                      dw_dtype=jnp.float32):
    """Pure-JAX reference. matmul_dtype / dw_dtype mirror the kernel's deliberate
    precision choices (bf16 MXU inputs, optional bf16 dw round trip) so the check
    isolates structural bugs from intended narrowing."""
    B, T, C = x.shape
    K = kernel_size
    pad_left = (K - 1) // 2
    mean = jnp.mean(x, -1, keepdims=True)
    var = jnp.mean((x - mean) ** 2, -1, keepdims=True)
    y = (x - mean) / jnp.sqrt(var + EPS) * p['ln_w'][0] + p['ln_b'][0]
    h = jnp.einsum('btc,cd->btd', y.astype(matmul_dtype), p['w0'].astype(matmul_dtype),
                   preferred_element_type=jnp.float32) + p['b0'][0]
    g = h[..., :C] * jax.nn.sigmoid(h[..., C:])
    gp = jnp.pad(g, ((0, 0), (pad_left, K - 1 - pad_left), (0, 0)))
    dw = sum(p['w_dw'][k] * gp[:, k:k + T, :] for k in range(K)) + p['b_dw'][0]
    bm = jnp.mean(dw, axis=(0, 1))
    bv = jnp.mean((dw - bm) ** 2, axis=(0, 1))
    dwq = dw.astype(dw_dtype).astype(jnp.float32)     # models the bf16 HBM round trip
    bn = (dwq - bm) / jnp.sqrt(bv + EPS) * p['bn_g'][0] + p['bn_b'][0]
    s = bn * jax.nn.sigmoid(bn)
    o = jnp.einsum('btc,cd->btd', s.astype(matmul_dtype), p['w1'].astype(matmul_dtype),
                   preferred_element_type=jnp.float32) + p['b1'][0]
    return x + o


def init_params(key, idim, kernel_size):
    """Deterministic synthetic parameter init (shapes from ConvModule.__init__).

    1x1 conv weights are stored pre-transposed as (in, out); the depthwise conv weight
    (idim, 1, K) is stored as (K, idim); 1-D params are (1, C) rows for (sublane, lane)
    friendly layout.
    """
    ks = jax.random.split(key, 8)
    C, K = idim, kernel_size
    return {
        'ln_w': jnp.ones((1, C), jnp.float32)
                + 0.1 * jax.random.normal(ks[0], (1, C), jnp.float32),
        'ln_b': 0.1 * jax.random.normal(ks[1], (1, C), jnp.float32),
        'w0':   0.1 * jax.random.normal(ks[2], (C, 2 * C), jnp.float32),
        'b0':   0.1 * jax.random.normal(ks[3], (1, 2 * C), jnp.float32),
        'w_dw': 0.1 * jax.random.normal(ks[4], (K, C), jnp.float32),
        'b_dw': 0.1 * jax.random.normal(ks[5], (1, C), jnp.float32),
        'bn_g': jnp.ones((1, C), jnp.float32),
        'bn_b': jnp.zeros((1, C), jnp.float32),
        'w1':   0.1 * jax.random.normal(ks[6], (C, C), jnp.float32),
        'b1':   0.1 * jax.random.normal(ks[7], (1, C), jnp.float32),
    }


if __name__ == "__main__":
    B, T, IDIM, KSIZE = 2, 16, 32, 8   # small demo shapes; multiplier=1

    key = jax.random.PRNGKey(0)
    kx, kp = jax.random.split(key)
    x = jax.random.normal(kx, (B, T, IDIM), jnp.float32)
    params = init_params(kp, IDIM, KSIZE)

    # Matched-precision references (review: "compare against a bf16 reference").
    ref_fused = reference_forward(x, params, KSIZE, matmul_dtype=MATMUL_DTYPE)
    ref_split = reference_forward(x, params, KSIZE, matmul_dtype=MATMUL_DTYPE,
                                  dw_dtype=DW_STORE_DTYPE)

    # Exercise both execution paths (fused VMEM-resident dw, and the two-pass
    # HBM-round-trip fallback used when dw would not fit in VMEM).
    checks = [
        ("fused", conv_module_forward(x, params, kernel_size=KSIZE, fuse=True), ref_fused),
        ("two_pass", conv_module_forward(x, params, kernel_size=KSIZE, fuse=False), ref_split),
    ]
    for name, out, ref in checks:
        out = jax.block_until_ready(out)
        assert out.shape == (B, T, IDIM) and out.dtype == jnp.float32
        if not jnp.allclose(out, ref, atol=5e-3, rtol=5e-3):
            err = float(jnp.max(jnp.abs(out - ref)))
            raise RuntimeError(
                f"Pallas kernel ({name}) does not match reference; max|err|={err:.3e}")
    print("KERNEL_OK")
</pallas_src>

<mosaic_0001>
module attributes {stable_mosaic.version = 11 : i64} {
  func.func @_fused_kernel(%arg0: i32, %arg1: i32, %arg2: memref<2x16x32xf32, #tpu.memory_space<vmem>>, %arg3: memref<1x32xf32, #tpu.memory_space<vmem>>, %arg4: memref<1x32xf32, #tpu.memory_space<vmem>>, %arg5: memref<32x32xbf16, #tpu.memory_space<vmem>>, %arg6: memref<1x32xf32, #tpu.memory_space<vmem>>, %arg7: memref<32x32xbf16, #tpu.memory_space<vmem>>, %arg8: memref<1x32xf32, #tpu.memory_space<vmem>>, %arg9: memref<8x32xf32, #tpu.memory_space<vmem>>, %arg10: memref<1x32xf32, #tpu.memory_space<vmem>>, %arg11: memref<1x32xf32, #tpu.memory_space<vmem>>, %arg12: memref<1x32xf32, #tpu.memory_space<vmem>>, %arg13: memref<32x32xbf16, #tpu.memory_space<vmem>>, %arg14: memref<1x32xf32, #tpu.memory_space<vmem>>, %arg15: memref<2x16x32xf32, #tpu.memory_space<vmem>>, %arg16: memref<2x23x32xf32, #tpu.memory_space<vmem>>, %arg17: memref<2x16x32xf32, #tpu.memory_space<vmem>>, %arg18: memref<2x32xf32, #tpu.memory_space<vmem>>, %arg19: memref<2x32xf32, #tpu.memory_space<vmem>>) attributes {dimension_semantics = [#tpu.dimension_semantics<arbitrary>, #tpu.dimension_semantics<arbitrary>], iteration_bounds = array<i64: 2, 1>, scalar_prefetch = 0 : i64, scratch_operands = 4 : i64, tpu.core_type = #tpu.core_type<tc>, window_params = [{transform_indices = @transform_0, window_bounds = array<i64: 2, 16, 32>}, {pipeline_mode = #tpu.pipeline_mode<synchronous>, transform_indices = @transform_1, window_bounds = array<i64: 1, 32>}, {pipeline_mode = #tpu.pipeline_mode<synchronous>, transform_indices = @transform_2, window_bounds = array<i64: 1, 32>}, {pipeline_mode = #tpu.pipeline_mode<synchronous>, transform_indices = @transform_3, window_bounds = array<i64: 32, 32>}, {pipeline_mode = #tpu.pipeline_mode<synchronous>, transform_indices = @transform_4, window_bounds = array<i64: 1, 32>}, {pipeline_mode = #tpu.pipeline_mode<synchronous>, transform_indices = @transform_5, window_bounds = array<i64: 32, 32>}, {pipeline_mode = #tpu.pipeline_mode<synchronous>, transform_indices = @transform_6, window_bounds = array<i64: 1, 32>}, {pipeline_mode = #tpu.pipeline_mode<synchronous>, transform_indices = @transform_7, window_bounds = array<i64: 8, 32>}, {pipeline_mode = #tpu.pipeline_mode<synchronous>, transform_indices = @transform_8, window_bounds = array<i64: 1, 32>}, {pipeline_mode = #tpu.pipeline_mode<synchronous>, transform_indices = @transform_9, window_bounds = array<i64: 1, 32>}, {pipeline_mode = #tpu.pipeline_mode<synchronous>, transform_indices = @transform_10, window_bounds = array<i64: 1, 32>}, {pipeline_mode = #tpu.pipeline_mode<synchronous>, transform_indices = @transform_11, window_bounds = array<i64: 32, 32>}, {pipeline_mode = #tpu.pipeline_mode<synchronous>, transform_indices = @transform_12, window_bounds = array<i64: 1, 32>}, {transform_indices = @transform_13, window_bounds = array<i64: 2, 16, 32>}]} {
    %c2_i32 = arith.constant 2 : i32
    %0 = arith.muli %arg1, %c2_i32 : i32
    %1 = tpu.assume_multiple %0, 2 : i32
    %c0_i32 = arith.constant 0 : i32
    %2 = arith.cmpi eq, %arg0, %c0_i32 : i32
    %3 = arith.extui %2 : i1 to i32
    %c0_i32_0 = arith.constant 0 : i32
    %4 = arith.cmpi ne, %3, %c0_i32_0 : i32
    scf.if %4 {
      %c0_i32_2 = arith.constant 0 : i32
      %8 = arith.cmpi eq, %arg1, %c0_i32_2 : i32
      %9 = arith.extui %8 : i1 to i32
      %c0_i32_3 = arith.constant 0 : i32
      %10 = arith.cmpi ne, %9, %c0_i32_3 : i32
      scf.if %10 {
        %cst_69 = arith.constant 0.000000e+00 : f32
        %145 = vector.broadcast %cst_69 : f32 to vector<2x32xf32>
        %c0_70 = arith.constant 0 : index
        %c0_71 = arith.constant 0 : index
        %146 = vector.load %arg18[%c0_70, %c0_71] : memref<2x32xf32, #tpu.memory_space<vmem>>, vector<2x32xf32>
        tpu.vector_store %arg18[%c0_70, %c0_71], %145 {strides = array<i32>} : memref<2x32xf32, #tpu.memory_space<vmem>>, vector<2x32xf32>,
      } else {
      }
      %c0 = arith.constant 0 : index
      %c0_4 = arith.constant 0 : index
      %c0_5 = arith.constant 0 : index
      %11 = vector.load %arg2[%c0, %c0_4, %c0_5] : memref<2x16x32xf32, #tpu.memory_space<vmem>>, vector<2x16x32xf32>
      %c0_6 = arith.constant 0 : index
      %c0_7 = arith.constant 0 : index
      %12 = vector.load %arg3[%c0_6, %c0_7] : memref<1x32xf32, #tpu.memory_space<vmem>>, vector<1x32xf32>
      %13 = vector.shape_cast %12 : vector<1x32xf32> to vector<32xf32>
      %c0_8 = arith.constant 0 : index
      %c0_9 = arith.constant 0 : index
      %14 = vector.load %arg4[%c0_8, %c0_9] : memref<1x32xf32, #tpu.memory_space<vmem>>, vector<1x32xf32>
      %15 = vector.shape_cast %14 : vector<1x32xf32> to vector<32xf32>
      %c0_10 = arith.constant 0 : index
      %c0_11 = arith.constant 0 : index
      %16 = vector.load %arg5[%c0_10, %c0_11] : memref<32x32xbf16, #tpu.memory_space<vmem>>, vector<32x32xbf16>
      %c0_12 = arith.constant 0 : index
      %c0_13 = arith.constant 0 : index
      %17 = vector.load %arg6[%c0_12, %c0_13] : memref<1x32xf32, #tpu.memory_space<vmem>>, vector<1x32xf32>
      %18 = vector.shape_cast %17 : vector<1x32xf32> to vector<32xf32>
      %c0_14 = arith.constant 0 : index
      %c0_15 = arith.constant 0 : index
      %19 = vector.load %arg7[%c0_14, %c0_15] : memref<32x32xbf16, #tpu.memory_space<vmem>>, vector<32x32xbf16>
      %c0_16 = arith.constant 0 : index
      %c0_17 = arith.constant 0 : index
      %20 = vector.load %arg8[%c0_16, %c0_17] : memref<1x32xf32, #tpu.memory_space<vmem>>, vector<1x32xf32>
      %21 = vector.shape_cast %20 : vector<1x32xf32> to vector<32xf32>
      %c0_18 = arith.constant 0 : index
      %c0_19 = arith.constant 0 : index
      %22 = vector.load %arg9[%c0_18, %c0_19] : memref<8x32xf32, #tpu.memory_space<vmem>>, vector<8x32xf32>
      %c0_20 = arith.constant 0 : index
      %c0_21 = arith.constant 0 : index
      %23 = vector.load %arg10[%c0_20, %c0_21] : memref<1x32xf32, #tpu.memory_space<vmem>>, vector<1x32xf32>
      %24 = vector.shape_cast %23 : vector<1x32xf32> to vector<32xf32>
      %25 = vector.shape_cast %11 : vector<2x16x32xf32> to vector<32x32xf32>
      %cst = arith.constant dense<0.000000e+00> : vector<32xf32>
      %26 = vector.multi_reduction <add>, %25, %cst [1] : vector<32x32xf32> to vector<32xf32>
      %27 = vector.shape_cast %26 : vector<32xf32> to vector<32x1xf32>
      %cst_22 = arith.constant 3.200000e+01 : f32
      %28 = vector.broadcast %cst_22 : f32 to vector<32x1xf32>
      %29 = arith.divf %27, %28 : vector<32x1xf32>
      %30 = vector.broadcast %29 : vector<32x1xf32> to vector<32x32xf32>
      %31 = arith.subf %25, %30 : vector<32x32xf32>
      %32 = arith.mulf %31, %31 : vector<32x32xf32>
      %cst_23 = arith.constant dense<0.000000e+00> : vector<32xf32>
      %33 = vector.multi_reduction <add>, %32, %cst_23 [1] : vector<32x32xf32> to vector<32xf32>
      %34 = vector.shape_cast %33 : vector<32xf32> to vector<32x1xf32>
      %cst_24 = arith.constant 3.200000e+01 : f32
      %35 = vector.broadcast %cst_24 : f32 to vector<32x1xf32>
      %36 = arith.divf %34, %35 : vector<32x1xf32>
      %37 = vector.broadcast %29 : vector<32x1xf32> to vector<32x32xf32>
      %38 = arith.subf %25, %37 : vector<32x32xf32>
      %cst_25 = arith.constant 9.99999974E-6 : f32
      %39 = vector.broadcast %cst_25 : f32 to vector<32x1xf32>
      %40 = arith.addf %36, %39 : vector<32x1xf32>
      %41 = math.rsqrt %40 : vector<32x1xf32>
      %42 = vector.broadcast %41 : vector<32x1xf32> to vector<32x32xf32>
      %43 = arith.mulf %38, %42 : vector<32x32xf32>
      %44 = vector.shape_cast %13 : vector<32xf32> to vector<1x32xf32>
      %45 = vector.broadcast %44 : vector<1x32xf32> to vector<32x32xf32>
      %46 = arith.mulf %43, %45 : vector<32x32xf32>
      %47 = vector.shape_cast %15 : vector<32xf32> to vector<1x32xf32>
      %48 = vector.broadcast %47 : vector<1x32xf32> to vector<32x32xf32>
      %49 = arith.addf %46, %48 : vector<32x32xf32>
      %50 = arith.truncf %49 : vector<32x32xf32> to vector<32x32xbf16>
      %cst_26 = arith.constant dense<0.000000e+00> : vector<32x32xf32>
      %51 = tpu.matmul %50, %16, %cst_26 {dimension_numbers = #tpu.dot_dimension_numbers<[1], [0], [0], [1], [0, 0, 1, 1], [], []>} : vector<32x32xbf16>, vector<32x32xbf16>, vector<32x32xf32> -> vector<32x32xf32>
      %52 = vector.shape_cast %18 : vector<32xf32> to vector<1x32xf32>
      %53 = vector.broadcast %52 : vector<1x32xf32> to vector<32x32xf32>
      %54 = arith.addf %51, %53 : vector<32x32xf32>
      %cst_27 = arith.constant dense<0.000000e+00> : vector<32x32xf32>
      %55 = tpu.matmul %50, %19, %cst_27 {dimension_numbers = #tpu.dot_dimension_numbers<[1], [0], [0], [1], [0, 0, 1, 1], [], []>} : vector<32x32xbf16>, vector<32x32xbf16>, vector<32x32xf32> -> vector<32x32xf32>
      %56 = vector.shape_cast %21 : vector<32xf32> to vector<1x32xf32>
      %57 = vector.broadcast %56 : vector<1x32xf32> to vector<32x32xf32>
      %58 = arith.addf %55, %57 : vector<32x32xf32>
      %59 = arith.negf %58 : vector<32x32xf32>
      %60 = math.exp %59 : vector<32x32xf32>
      %cst_28 = arith.constant 1.000000e+00 : f32
      %61 = vector.broadcast %cst_28 : f32 to vector<32x32xf32>
      %62 = arith.addf %61, %60 : vector<32x32xf32>
      %63 = arith.divf %61, %62 : vector<32x32xf32>
      %64 = arith.mulf %54, %63 : vector<32x32xf32>
      %65 = vector.shape_cast %64 : vector<32x32xf32> to vector<2x16x32xf32>
      %cst_29 = arith.constant 0.000000e+00 : f32
      %66 = vector.broadcast %cst_29 : f32 to vector<2x3x32xf32>
      %c0_30 = arith.constant 0 : index
      %c0_31 = arith.constant 0 : index
      %c0_32 = arith.constant 0 : index
      %67 = vector.load %arg16[%c0_30, %c0_31, %c0_32] : memref<2x23x32xf32, #tpu.memory_space<vmem>>, vector<2x3x32xf32>
      tpu.vector_store %arg16[%c0_30, %c0_31, %c0_32], %66 {strides = array<i32>} : memref<2x23x32xf32, #tpu.memory_space<vmem>>, vector<2x3x32xf32>,
      %cst_33 = arith.constant 0.000000e+00 : f32
      %68 = vector.broadcast %cst_33 : f32 to vector<2x4x32xf32>
      %c0_34 = arith.constant 0 : index
      %c19 = arith.constant 19 : index
      %c0_35 = arith.constant 0 : index
      %69 = vector.load %arg16[%c0_34, %c19, %c0_35] : memref<2x23x32xf32, #tpu.memory_space<vmem>>, vector<2x4x32xf32>
      tpu.vector_store %arg16[%c0_34, %c19, %c0_35], %68 {strides = array<i32>} : memref<2x23x32xf32, #tpu.memory_space<vmem>>, vector<2x4x32xf32>,
      %c0_36 = arith.constant 0 : index
      %c3 = arith.constant 3 : index
      %c0_37 = arith.constant 0 : index
      %70 = vector.load %arg16[%c0_36, %c3, %c0_37] : memref<2x23x32xf32, #tpu.memory_space<vmem>>, vector<2x16x32xf32>
      tpu.vector_store %arg16[%c0_36, %c3, %c0_37], %65 {strides = array<i32>} : memref<2x23x32xf32, #tpu.memory_space<vmem>>, vector<2x16x32xf32>,
      %cst_38 = arith.constant 0.000000e+00 : f32
      %71 = vector.broadcast %cst_38 : f32 to vector<2x16x32xf32>
      %72 = vector.extract_strided_slice %22 {offsets = [0, 0], sizes = [1, 32], strides = [1, 1]} : vector<8x32xf32> to vector<1x32xf32>
      %73 = vector.shape_cast %72 : vector<1x32xf32> to vector<32xf32>
      %c0_39 = arith.constant 0 : index
      %c0_40 = arith.constant 0 : index
      %c0_41 = arith.constant 0 : index
      %74 = vector.load %arg16[%c0_39, %c0_40, %c0_41] : memref<2x23x32xf32, #tpu.memory_space<vmem>>, vector<2x16x32xf32>
      %75 = vector.shape_cast %73 : vector<32xf32> to vector<1x1x32xf32>
      %76 = vector.broadcast %75 : vector<1x1x32xf32> to vector<2x16x32xf32>
      %77 = arith.mulf %76, %74 : vector<2x16x32xf32>
      %78 = arith.addf %71, %77 : vector<2x16x32xf32>
      %79 = vector.extract_strided_slice %22 {offsets = [1, 0], sizes = [1, 32], strides = [1, 1]} : vector<8x32xf32> to vector<1x32xf32>
      %80 = vector.shape_cast %79 : vector<1x32xf32> to vector<32xf32>
      %c0_42 = arith.constant 0 : index
      %c1 = arith.constant 1 : index
      %c0_43 = arith.constant 0 : index
      %81 = vector.load %arg16[%c0_42, %c1, %c0_43] : memref<2x23x32xf32, #tpu.memory_space<vmem>>, vector<2x16x32xf32>
      %82 = vector.shape_cast %80 : vector<32xf32> to vector<1x1x32xf32>
      %83 = vector.broadcast %82 : vector<1x1x32xf32> to vector<2x16x32xf32>
      %84 = arith.mulf %83, %81 : vector<2x16x32xf32>
      %85 = arith.addf %78, %84 : vector<2x16x32xf32>
      %86 = vector.extract_strided_slice %22 {offsets = [2, 0], sizes = [1, 32], strides = [1, 1]} : vector<8x32xf32> to vector<1x32xf32>
      %87 = vector.shape_cast %86 : vector<1x32xf32> to vector<32xf32>
      %c0_44 = arith.constant 0 : index
      %c2 = arith.constant 2 : index
      %c0_45 = arith.constant 0 : index
      %88 = vector.load %arg16[%c0_44, %c2, %c0_45] : memref<2x23x32xf32, #tpu.memory_space<vmem>>, vector<2x16x32xf32>
      %89 = vector.shape_cast %87 : vector<32xf32> to vector<1x1x32xf32>
      %90 = vector.broadcast %89 : vector<1x1x32xf32> to vector<2x16x32xf32>
      %91 = arith.mulf %90, %88 : vector<2x16x32xf32>
      %92 = arith.addf %85, %91 : vector<2x16x32xf32>
      %93 = vector.extract_strided_slice %22 {offsets = [3, 0], sizes = [1, 32], strides = [1, 1]} : vector<8x32xf32> to vector<1x32xf32>
      %94 = vector.shape_cast %93 : vector<1x32xf32> to vector<32xf32>
      %c0_46 = arith.constant 0 : index
      %c3_47 = arith.constant 3 : index
      %c0_48 = arith.constant 0 : index
      %95 = vector.load %arg16[%c0_46, %c3_47, %c0_48] : memref<2x23x32xf32, #tpu.memory_space<vmem>>, vector<2x16x32xf32>
      %96 = vector.shape_cast %94 : vector<32xf32> to vector<1x1x32xf32>
      %97 = vector.broadcast %96 : vector<1x1x32xf32> to vector<2x16x32xf32>
      %98 = arith.mulf %97, %95 : vector<2x16x32xf32>
      %99 = arith.addf %92, %98 : vector<2x16x32xf32>
      %100 = vector.extract_strided_slice %22 {offsets = [4, 0], sizes = [1, 32], strides = [1, 1]} : vector<8x32xf32> to vector<1x32xf32>
      %101 = vector.shape_cast %100 : vector<1x32xf32> to vector<32xf32>
      %c0_49 = arith.constant 0 : index
      %c4 = arith.constant 4 : index
      %c0_50 = arith.constant 0 : index
      %102 = vector.load %arg16[%c0_49, %c4, %c0_50] : memref<2x23x32xf32, #tpu.memory_space<vmem>>, vector<2x16x32xf32>
      %103 = vector.shape_cast %101 : vector<32xf32> to vector<1x1x32xf32>
      %104 = vector.broadcast %103 : vector<1x1x32xf32> to vector<2x16x32xf32>
      %105 = arith.mulf %104, %102 : vector<2x16x32xf32>
      %106 = arith.addf %99, %105 : vector<2x16x32xf32>
      %107 = vector.extract_strided_slice %22 {offsets = [5, 0], sizes = [1, 32], strides = [1, 1]} : vector<8x32xf32> to vector<1x32xf32>
      %108 = vector.shape_cast %107 : vector<1x32xf32> to vector<32xf32>
      %c0_51 = arith.constant 0 : index
      %c5 = arith.constant 5 : index
      %c0_52 = arith.constant 0 : index
      %109 = vector.load %arg16[%c0_51, %c5, %c0_52] : memref<2x23x32xf32, #tpu.memory_space<vmem>>, vector<2x16x32xf32>
      %110 = vector.shape_cast %108 : vector<32xf32> to vector<1x1x32xf32>
      %111 = vector.broadcast %110 : vector<1x1x32xf32> to vector<2x16x32xf32>
      %112 = arith.mulf %111, %109 : vector<2x16x32xf32>
      %113 = arith.addf %106, %112 : vector<2x16x32xf32>
      %114 = vector.extract_strided_slice %22 {offsets = [6, 0], sizes = [1, 32], strides = [1, 1]} : vector<8x32xf32> to vector<1x32xf32>
      %115 = vector.shape_cast %114 : vector<1x32xf32> to vector<32xf32>
      %c0_53 = arith.constant 0 : index
      %c6 = arith.constant 6 : index
      %c0_54 = arith.constant 0 : index
      %116 = vector.load %arg16[%c0_53, %c6, %c0_54] : memref<2x23x32xf32, #tpu.memory_space<vmem>>, vector<2x16x32xf32>
      %117 = vector.shape_cast %115 : vector<32xf32> to vector<1x1x32xf32>
      %118 = vector.broadcast %117 : vector<1x1x32xf32> to vector<2x16x32xf32>
      %119 = arith.mulf %118, %116 : vector<2x16x32xf32>
      %120 = arith.addf %113, %119 : vector<2x16x32xf32>
      %121 = vector.extract_strided_slice %22 {offsets = [7, 0], sizes = [1, 32], strides = [1, 1]} : vector<8x32xf32> to vector<1x32xf32>
      %122 = vector.shape_cast %121 : vector<1x32xf32> to vector<32xf32>
      %c0_55 = arith.constant 0 : index
      %c7 = arith.constant 7 : index
      %c0_56 = arith.constant 0 : index
      %123 = vector.load %arg16[%c0_55, %c7, %c0_56] : memref<2x23x32xf32, #tpu.memory_space<vmem>>, vector<2x16x32xf32>
      %124 = vector.shape_cast %122 : vector<32xf32> to vector<1x1x32xf32>
      %125 = vector.broadcast %124 : vector<1x1x32xf32> to vector<2x16x32xf32>
      %126 = arith.mulf %125, %123 : vector<2x16x32xf32>
      %127 = arith.addf %120, %126 : vector<2x16x32xf32>
      %128 = vector.shape_cast %24 : vector<32xf32> to vector<1x1x32xf32>
      %129 = vector.broadcast %128 : vector<1x1x32xf32> to vector<2x16x32xf32>
      %130 = arith.addf %127, %129 : vector<2x16x32xf32>
      %131 = arith.index_cast %1 : i32 to index
      %c0_57 = arith.constant 0 : index
      %c0_58 = arith.constant 0 : index
      %132 = vector.load %arg17[%131, %c0_57, %c0_58] : memref<2x16x32xf32, #tpu.memory_space<vmem>>, vector<2x16x32xf32>
      tpu.vector_store %arg17[%131, %c0_57, %c0_58], %130 {strides = array<i32>} : memref<2x16x32xf32, #tpu.memory_space<vmem>>, vector<2x16x32xf32>,
      %133 = vector.shape_cast %130 : vector<2x16x32xf32> to vector<32x32xf32>
      %c0_59 = arith.constant 0 : index
      %c0_60 = arith.constant 0 : index
      %134 = vector.load %arg18[%c0_59, %c0_60] : memref<2x32xf32, #tpu.memory_space<vmem>>, vector<1x32xf32>
      %cst_61 = arith.constant dense<0.000000e+00> : vector<32xf32>
      %135 = vector.multi_reduction <add>, %133, %cst_61 [0] : vector<32x32xf32> to vector<32xf32>
      %136 = vector.shape_cast %135 : vector<32xf32> to vector<1x32xf32>
      %137 = arith.addf %134, %136 : vector<1x32xf32>
      %c0_62 = arith.constant 0 : index
      %c0_63 = arith.constant 0 : index
      %138 = vector.load %arg18[%c0_62, %c0_63] : memref<2x32xf32, #tpu.memory_space<vmem>>, vector<1x32xf32>
      tpu.vector_store %arg18[%c0_62, %c0_63], %137 {strides = array<i32>} : memref<2x32xf32, #tpu.memory_space<vmem>>, vector<1x32xf32>,
      %c1_64 = arith.constant 1 : index
      %c0_65 = arith.constant 0 : index
      %139 = vector.load %arg18[%c1_64, %c0_65] : memref<2x32xf32, #tpu.memory_space<vmem>>, vector<1x32xf32>
      %140 = arith.mulf %133, %133 : vector<32x32xf32>
      %cst_66 = arith.constant dense<0.000000e+00> : vector<32xf32>
      %141 = vector.multi_reduction <add>, %140, %cst_66 [0] : vector<32x32xf32> to vector<32xf32>
      %142 = vector.shape_cast %141 : vector<32xf32> to vector<1x32xf32>
      %143 = arith.addf %139, %142 : vector<1x32xf32>
      %c1_67 = arith.constant 1 : index
      %c0_68 = arith.constant 0 : index
      %144 = vector.load %arg18[%c1_67, %c0_68] : memref<2x32xf32, #tpu.memory_space<vmem>>, vector<1x32xf32>
      tpu.vector_store %arg18[%c1_67, %c0_68], %143 {strides = array<i32>} : memref<2x32xf32, #tpu.memory_space<vmem>>, vector<1x32xf32>,
    } else {
    }
    %c1_i32 = arith.constant 1 : i32
    %5 = arith.cmpi eq, %arg0, %c1_i32 : i32
    %6 = arith.extui %5 : i1 to i32
    %c0_i32_1 = arith.constant 0 : i32
    %7 = arith.cmpi ne, %6, %c0_i32_1 : i32
    scf.if %7 {
      %c0_i32_2 = arith.constant 0 : i32
      %8 = arith.cmpi eq, %arg1, %c0_i32_2 : i32
      %9 = arith.extui %8 : i1 to i32
      %c0_i32_3 = arith.constant 0 : i32
      %10 = arith.cmpi ne, %9, %c0_i32_3 : i32
      scf.if %10 {
        %c0_19 = arith.constant 0 : index
        %c0_20 = arith.constant 0 : index
        %36 = vector.load %arg18[%c0_19, %c0_20] : memref<2x32xf32, #tpu.memory_space<vmem>>, vector<1x32xf32>
        %cst_21 = arith.constant 3.125000e-02 : f32
        %37 = vector.broadcast %cst_21 : f32 to vector<1x32xf32>
        %38 = arith.mulf %36, %37 : vector<1x32xf32>
        %c1_22 = arith.constant 1 : index
        %c0_23 = arith.constant 0 : index
        %39 = vector.load %arg18[%c1_22, %c0_23] : memref<2x32xf32, #tpu.memory_space<vmem>>, vector<1x32xf32>
        %cst_24 = arith.constant 3.125000e-02 : f32
        %40 = vector.broadcast %cst_24 : f32 to vector<1x32xf32>
        %41 = arith.mulf %39, %40 : vector<1x32xf32>
        %42 = arith.mulf %38, %38 : vector<1x32xf32>
        %43 = arith.subf %41, %42 : vector<1x32xf32>
        %cst_25 = arith.constant 0.000000e+00 : f32
        %44 = vector.broadcast %cst_25 : f32 to vector<1x32xf32>
        %45 = arith.maximumf %43, %44 : vector<1x32xf32>
        %cst_26 = arith.constant 9.99999974E-6 : f32
        %46 = vector.broadcast %cst_26 : f32 to vector<1x32xf32>
        %47 = arith.addf %45, %46 : vector<1x32xf32>
        %48 = math.rsqrt %47 : vector<1x32xf32>
        %c0_27 = arith.constant 0 : index
        %c0_28 = arith.constant 0 : index
        %49 = vector.load %arg11[%c0_27, %c0_28] : memref<1x32xf32, #tpu.memory_space<vmem>>, vector<1x32xf32>
        %50 = arith.mulf %49, %48 : vector<1x32xf32>
        %c0_29 = arith.constant 0 : index
        %c0_30 = arith.constant 0 : index
        %51 = vector.load %arg19[%c0_29, %c0_30] : memref<2x32xf32, #tpu.memory_space<vmem>>, vector<1x32xf32>
        tpu.vector_store %arg19[%c0_29, %c0_30], %50 {strides = array<i32>} : memref<2x32xf32, #tpu.memory_space<vmem>>, vector<1x32xf32>,
        %c0_31 = arith.constant 0 : index
        %c0_32 = arith.constant 0 : index
        %52 = vector.load %arg12[%c0_31, %c0_32] : memref<1x32xf32, #tpu.memory_space<vmem>>, vector<1x32xf32>
        %53 = arith.mulf %38, %49 : vector<1x32xf32>
        %54 = arith.mulf %53, %48 : vector<1x32xf32>
        %55 = arith.subf %52, %54 : vector<1x32xf32>
        %c1_33 = arith.constant 1 : index
        %c0_34 = arith.constant 0 : index
        %56 = vector.load %arg19[%c1_33, %c0_34] : memref<2x32xf32, #tpu.memory_space<vmem>>, vector<1x32xf32>
        tpu.vector_store %arg19[%c1_33, %c0_34], %55 {strides = array<i32>} : memref<2x32xf32, #tpu.memory_space<vmem>>, vector<1x32xf32>,
      } else {
      }
      %11 = arith.index_cast %1 : i32 to index
      %c0 = arith.constant 0 : index
      %c0_4 = arith.constant 0 : index
      %12 = vector.load %arg17[%11, %c0, %c0_4] : memref<2x16x32xf32, #tpu.memory_space<vmem>>, vector<2x16x32xf32>
      %c0_5 = arith.constant 0 : index
      %c0_6 = arith.constant 0 : index
      %13 = vector.load %arg19[%c0_5, %c0_6] : memref<2x32xf32, #tpu.memory_space<vmem>>, vector<1x32xf32>
      %c1 = arith.constant 1 : index
      %c0_7 = arith.constant 0 : index
      %14 = vector.load %arg19[%c1, %c0_7] : memref<2x32xf32, #tpu.memory_space<vmem>>, vector<1x32xf32>
      %c0_8 = arith.constant 0 : index
      %c0_9 = arith.constant 0 : index
      %15 = vector.load %arg13[%c0_8, %c0_9] : memref<32x32xbf16, #tpu.memory_space<vmem>>, vector<32x32xbf16>
      %c0_10 = arith.constant 0 : index
      %c0_11 = arith.constant 0 : index
      %16 = vector.load %arg14[%c0_10, %c0_11] : memref<1x32xf32, #tpu.memory_space<vmem>>, vector<1x32xf32>
      %17 = vector.shape_cast %12 : vector<2x16x32xf32> to vector<32x32xf32>
      %18 = vector.broadcast %13 : vector<1x32xf32> to vector<32x32xf32>
      %19 = arith.mulf %17, %18 : vector<32x32xf32>
      %20 = vector.broadcast %14 : vector<1x32xf32> to vector<32x32xf32>
      %21 = arith.addf %19, %20 : vector<32x32xf32>
      %22 = arith.negf %21 : vector<32x32xf32>
      %23 = math.exp %22 : vector<32x32xf32>
      %cst = arith.constant 1.000000e+00 : f32
      %24 = vector.broadcast %cst : f32 to vector<32x32xf32>
      %25 = arith.addf %24, %23 : vector<32x32xf32>
      %26 = arith.divf %24, %25 : vector<32x32xf32>
      %27 = arith.mulf %21, %26 : vector<32x32xf32>
      %28 = arith.truncf %27 : vector<32x32xf32> to vector<32x32xbf16>
      %cst_12 = arith.constant dense<0.000000e+00> : vector<32x32xf32>
      %29 = tpu.matmul %28, %15, %cst_12 {dimension_numbers = #tpu.dot_dimension_numbers<[1], [0], [0], [1], [0, 0, 1, 1], [], []>} : vector<32x32xbf16>, vector<32x32xbf16>, vector<32x32xf32> -> vector<32x32xf32>
      %30 = vector.broadcast %16 : vector<1x32xf32> to vector<32x32xf32>
      %31 = arith.addf %29, %30 : vector<32x32xf32>
      %32 = vector.shape_cast %31 : vector<32x32xf32> to vector<2x16x32xf32>
      %c0_13 = arith.constant 0 : index
      %c0_14 = arith.constant 0 : index
      %c0_15 = arith.constant 0 : index
      %33 = vector.load %arg2[%c0_13, %c0_14, %c0_15] : memref<2x16x32xf32, #tpu.memory_space<vmem>>, vector<2x16x32xf32>
      %34 = arith.addf %33, %32 : vector<2x16x32xf32>
      %c0_16 = arith.constant 0 : index
      %c0_17 = arith.constant 0 : index
      %c0_18 = arith.constant 0 : index
      %35 = vector.load %arg15[%c0_16, %c0_17, %c0_18] : memref<2x16x32xf32, #tpu.memory_space<vmem>>, vector<2x16x32xf32>
      tpu.vector_store %arg15[%c0_16, %c0_17, %c0_18], %34 {strides = array<i32>} : memref<2x16x32xf32, #tpu.memory_space<vmem>>, vector<2x16x32xf32>,
    } else {
    }
    return
  }
  func.func @transform_0(%arg0: i32, %arg1: i32) -> (i32, i32, i32) {
    %c0_i32 = arith.constant 0 : i32
    %c0_i32_0 = arith.constant 0 : i32
    %c0_i32_1 = arith.constant 0 : i32
    return %arg1, %c0_i32, %c0_i32_0 : i32, i32, i32
  }
  func.func @transform_1(%arg0: i32, %arg1: i32) -> (i32, i32) {
    %c0_i32 = arith.constant 0 : i32
    %c0_i32_0 = arith.constant 0 : i32
    %c0_i32_1 = arith.constant 0 : i32
    return %c0_i32, %c0_i32_0 : i32, i32
  }
  func.func @transform_2(%arg0: i32, %arg1: i32) -> (i32, i32) {
    %c0_i32 = arith.constant 0 : i32
    %c0_i32_0 = arith.constant 0 : i32
    %c0_i32_1 = arith.constant 0 : i32
    return %c0_i32, %c0_i32_0 : i32, i32
  }
  func.func @transform_3(%arg0: i32, %arg1: i32) -> (i32, i32) {
    %c0_i32 = arith.constant 0 : i32
    %c0_i32_0 = arith.constant 0 : i32
    %c0_i32_1 = arith.constant 0 : i32
    return %c0_i32, %c0_i32_0 : i32, i32
  }
  func.func @transform_4(%arg0: i32, %arg1: i32) -> (i32, i32) {
    %c0_i32 = arith.constant 0 : i32
    %c0_i32_0 = arith.constant 0 : i32
    %c0_i32_1 = arith.constant 0 : i32
    return %c0_i32, %c0_i32_0 : i32, i32
  }
  func.func @transform_5(%arg0: i32, %arg1: i32) -> (i32, i32) {
    %c0_i32 = arith.constant 0 : i32
    %c0_i32_0 = arith.constant 0 : i32
    %c0_i32_1 = arith.constant 0 : i32
    return %c0_i32, %c0_i32_0 : i32, i32
  }
  func.func @transform_6(%arg0: i32, %arg1: i32) -> (i32, i32) {
    %c0_i32 = arith.constant 0 : i32
    %c0_i32_0 = arith.constant 0 : i32
    %c0_i32_1 = arith.constant 0 : i32
    return %c0_i32, %c0_i32_0 : i32, i32
  }
  func.func @transform_7(%arg0: i32, %arg1: i32) -> (i32, i32) {
    %c0_i32 = arith.constant 0 : i32
    %c0_i32_0 = arith.constant 0 : i32
    %c0_i32_1 = arith.constant 0 : i32
    return %c0_i32, %c0_i32_0 : i32, i32
  }
  func.func @transform_8(%arg0: i32, %arg1: i32) -> (i32, i32) {
    %c0_i32 = arith.constant 0 : i32
    %c0_i32_0 = arith.constant 0 : i32
    %c0_i32_1 = arith.constant 0 : i32
    return %c0_i32, %c0_i32_0 : i32, i32
  }
  func.func @transform_9(%arg0: i32, %arg1: i32) -> (i32, i32) {
    %c0_i32 = arith.constant 0 : i32
    %c0_i32_0 = arith.constant 0 : i32
    %c0_i32_1 = arith.constant 0 : i32
    return %c0_i32, %c0_i32_0 : i32, i32
  }
  func.func @transform_10(%arg0: i32, %arg1: i32) -> (i32, i32) {
    %c0_i32 = arith.constant 0 : i32
    %c0_i32_0 = arith.constant 0 : i32
    %c0_i32_1 = arith.constant 0 : i32
    return %c0_i32, %c0_i32_0 : i32, i32
  }
  func.func @transform_11(%arg0: i32, %arg1: i32) -> (i32, i32) {
    %c0_i32 = arith.constant 0 : i32
    %c0_i32_0 = arith.constant 0 : i32
    %c0_i32_1 = arith.constant 0 : i32
    return %c0_i32, %c0_i32_0 : i32, i32
  }
  func.func @transform_12(%arg0: i32, %arg1: i32) -> (i32, i32) {
    %c0_i32 = arith.constant 0 : i32
    %c0_i32_0 = arith.constant 0 : i32
    %c0_i32_1 = arith.constant 0 : i32
    return %c0_i32, %c0_i32_0 : i32, i32
  }
  func.func @transform_13(%arg0: i32, %arg1: i32) -> (i32, i32, i32) {
    %0 = arith.muli %arg1, %arg0 : i32
    %c0_i32 = arith.constant 0 : i32
    %c0_i32_0 = arith.constant 0 : i32
    %c0_i32_1 = arith.constant 0 : i32
    return %0, %c0_i32, %c0_i32_0 : i32, i32, i32
  }
}

</mosaic_0001>

<llo_original>
// kernel: conv_module_forward.1
$region0: #{conv_module_forward.1}
  #allocation0 [shape = 'u32[]', space=smem, size = 0x4, offset = 0x4, fixed_abs, tag = 'smem constant byte address 0x4 - core index']
  #allocation1 [shape = 'u32[72,128]{1,0:T(1,128)}', space=vmem, size = 0x9000, scoped, tag = 'internal scratch']
  #allocation2 [shape = 'f32[2,23,32]{2,1,0:T(8,128)}', space=vmem, size = 0x6000, scoped, tag = 'scratch operand']
  #allocation3 [shape = 'f32[2,16,32]{2,1,0:T(8,128)}', space=vmem, size = 0x4000, scoped, tag = 'scratch operand']
  #allocation4 [shape = 'f32[2,32]{1,0:T(2,128)}', space=vmem, size = 0x400, scoped, tag = 'scratch operand']
  #allocation5 [shape = 'f32[2,32]{1,0:T(2,128)}', space=vmem, size = 0x400, scoped, tag = 'scratch operand']
  %s0 = inlined_call_operand.vmem [shape: f32[2,16,32], index: 0, kind: input, shape index: {}]
  %s1 = inlined_call_operand.vmem [shape: f32[1,32], index: 1, kind: input, shape index: {}]
  %s2 = inlined_call_operand.vmem [shape: f32[1,32], index: 2, kind: input, shape index: {}]
  %s3 = inlined_call_operand.vmem [shape: bf16[32,32], index: 3, kind: input, shape index: {}]
  %s4 = inlined_call_operand.vmem [shape: f32[1,32], index: 4, kind: input, shape index: {}]
  %s5 = inlined_call_operand.vmem [shape: bf16[32,32], index: 5, kind: input, shape index: {}]
  %s6 = inlined_call_operand.vmem [shape: f32[1,32], index: 6, kind: input, shape index: {}]
  %s7 = inlined_call_operand.vmem [shape: f32[8,32], index: 7, kind: input, shape index: {}]
  %s8 = inlined_call_operand.vmem [shape: f32[1,32], index: 8, kind: input, shape index: {}]
  %s9 = inlined_call_operand.vmem [shape: f32[1,32], index: 9, kind: input, shape index: {}]
  %s10 = inlined_call_operand.vmem [shape: f32[1,32], index: 10, kind: input, shape index: {}]
  %s11 = inlined_call_operand.vmem [shape: bf16[32,32], index: 11, kind: input, shape index: {}]
  %s12 = inlined_call_operand.vmem [shape: f32[1,32], index: 12, kind: input, shape index: {}]
  %s13 = inlined_call_operand.hbm [shape: f32[2,16,32], index: 13, kind: output, shape index: {}]
  %s14 = sld [smem:[#allocation0]]
  $region101: #{conv_module_forward.1} parent=0
    _
  %s16 = ssub.s32 1, %s14
  %s17 = scalar_select 0, %s16, %s14
  $region1: #{conv_module_forward.1} parent=0
    #allocation6 [shape = 'u8[32768]{0}', space=vmem, size = 0x8000, scoped, tag = 'output window, operand 0']
    #allocation7 [shape = 's32[2]{0}', space=sflag, size = 0x8, scoped, tag = 'scoped memory for conv_module_forward.1']
    %18 = vsyncpa [#allocation7], 0
    %s19 = scalar_lea.sflag [#allocation7], 1
    %20 = vsyncpa %s19, 0
    loop: start=0, step=1, limit=4
    $region2: #{conv_module_forward.1} parent=1 // loop_pre_header
      _
    $region3: #{conv_module_forward.1} parent=1 // loop_header
      %s22 = sphi 0, %s26
      %p23 = scmp.ge.s32.totalorder %s22, 4
      %s29 = sphi 0, %s41
      %s30 = sphi 0, %s37
      %s31 = sphi 0, %s29
      %s32 = sphi 0, %s30
      %s33 = sphi 0, %s31
      %s34 = sphi 0, %s32
      %s44 = sphi 0, %s46
      %s47 = sphi 0, %s44
      %s48 = sphi 0, %s47
      %s64 = sphi 0, %s48
      %s68 = sphi 0, %s68
      %s70 = sphi 0, %s68
      %s71 = sphi 0, %s70
      %s85 = sphi 0, %s71
      %s89 = sphi 0, %s89
      %s91 = sphi 0, %s89
      %s92 = sphi 0, %s91
      %s106 = sphi 0, %s92
      %s110 = sphi 0, %s110
      %s112 = sphi 0, %s110
      %s113 = sphi 0, %s112
      %s127 = sphi 0, %s113
      %s131 = sphi 0, %s131
      %s133 = sphi 0, %s131
      %s134 = sphi 0, %s133
      %s148 = sphi 0, %s134
      %s152 = sphi 0, %s152
      %s154 = sphi 0, %s152
      %s155 = sphi 0, %s154
      %s169 = sphi 0, %s155
      %s173 = sphi 0, %s173
      %s175 = sphi 0, %s173
      %s176 = sphi 0, %s175
      %s190 = sphi 0, %s176
      %s194 = sphi 0, %s194
      %s196 = sphi 0, %s194
      %s197 = sphi 0, %s196
      %s211 = sphi 0, %s197
      %s215 = sphi 0, %s215
      %s217 = sphi 0, %s215
      %s218 = sphi 0, %s217
      %s232 = sphi 0, %s218
      %s236 = sphi 0, %s236
      %s238 = sphi 0, %s236
      %s239 = sphi 0, %s238
      %s253 = sphi 0, %s239
      %s257 = sphi 0, %s257
      %s259 = sphi 0, %s257
      %s260 = sphi 0, %s259
      %s274 = sphi 0, %s260
      %s278 = sphi 0, %s278
      %s280 = sphi 0, %s278
      %s281 = sphi 0, %s280
      %s295 = sphi 0, %s281
      %s299 = sphi 0, %s299
      %s301 = sphi 0, %s299
      %s302 = sphi 0, %s301
      %s316 = sphi 0, %s302
      %s324 = sphi 0, %s326
      %s327 = sphi 0, %s324
      %s328 = sphi 0, %s327
      %s344 = sphi 0, %s328
    $region4: #{conv_module_forward.1} parent=1 // loop_header_branch
      %25 = sbr.rel (%p23) target = $region8
    $region5: #{conv_module_forward.1} parent=1 // loop_body
      %s27 = ssub.s32 %s22, 1
      %s28 = ssub.s32 %s22, 2
      %s35 = sadd.s32 1, %s30
      %p36 = scmp.ge.s32.totalorder %s35, 1
      %s37 = scalar_select %p36, 0, %s35
      %s38 = sadd.s32 1, %s29
      %s39 = scalar_select %p36, %s38, %s29
      %p40 = scmp.ge.s32.totalorder %s39, 2
      %s41 = scalar_select %p40, 0, %s39
      %s42 = ssub.s32 %s30, %s37
      %p43 = scmp.eq.s32.totalorder %s42, 0
      %s45 = sadd.s32 %s44, 1
      %s46 = scalar_select %p43, %s44, %s45
      %p49 = pneg %p43
      %p50 = scmp.eq.s32.totalorder %s22, 1
      %p51 = por %p49, %p50
      %p52 = scmp.ne.s32.totalorder %s44, %s47
      %p53 = scmp.eq.s32.totalorder %s22, 0
      %p54 = por %p52, %p53
      %p55 = scmp.ne.s32.totalorder %s44, %s47
      %p56 = scmp.eq.s32.totalorder %s27, 1
      %p57 = por %p55, %p56
      %p58 = scmp.ne.s32.totalorder %s47, %s48
      %p59 = scmp.eq.s32.totalorder %s27, 0
      %p60 = por %p58, %p59
      %p61 = scmp.ne.s32.totalorder %s47, %s48
      %p62 = scmp.eq.s32.totalorder %s28, 1
      %p63 = por %p61, %p62
      %p65 = scmp.ne.s32.totalorder %s48, %s64
      %p66 = scmp.eq.s32.totalorder %s28, 0
      %p67 = por %p65, %p66
      %s69 = sadd.s32 %s68, 1
      %p72 = scmp.eq.s32.totalorder %s22, 1
      %p73 = scmp.ne.s32.totalorder %s68, %s70
      %p74 = scmp.eq.s32.totalorder %s22, 0
      %p75 = por %p73, %p74
      %p76 = scmp.ne.s32.totalorder %s68, %s70
      %p77 = scmp.eq.s32.totalorder %s27, 1
      %p78 = por %p76, %p77
      %p79 = scmp.ne.s32.totalorder %s70, %s71
      %p80 = scmp.eq.s32.totalorder %s27, 0
      %p81 = por %p79, %p80
      %p82 = scmp.ne.s32.totalorder %s70, %s71
      %p83 = scmp.eq.s32.totalorder %s28, 1
      %p84 = por %p82, %p83
      %p86 = scmp.ne.s32.totalorder %s71, %s85
      %p87 = scmp.eq.s32.totalorder %s28, 0
      %p88 = por %p86, %p87
      %s90 = sadd.s32 %s89, 1
      %p93 = scmp.eq.s32.totalorder %s22, 1
      %p94 = scmp.ne.s32.totalorder %s89, %s91
      %p95 = scmp.eq.s32.totalorder %s22, 0
      %p96 = por %p94, %p95
      %p97 = scmp.ne.s32.totalorder %s89, %s91
      %p98 = scmp.eq.s32.totalorder %s27, 1
      %p99 = por %p97, %p98
      %p100 = scmp.ne.s32.totalorder %s91, %s92
      %p101 = scmp.eq.s32.totalorder %s27, 0
      %p102 = por %p100, %p101
      %p103 = scmp.ne.s32.totalorder %s91, %s92
      %p104 = scmp.eq.s32.totalorder %s28, 1
      %p105 = por %p103, %p104
      %p107 = scmp.ne.s32.totalorder %s92, %s106
      %p108 = scmp.eq.s32.totalorder %s28, 0
      %p109 = por %p107, %p108
      %s111 = sadd.s32 %s110, 1
      %p114 = scmp.eq.s32.totalorder %s22, 1
      %p115 = scmp.ne.s32.totalorder %s110, %s112
      %p116 = scmp.eq.s32.totalorder %s22, 0
      %p117 = por %p115, %p116
      %p118 = scmp.ne.s32.totalorder %s110, %s112
      %p119 = scmp.eq.s32.totalorder %s27, 1
      %p120 = por %p118, %p119
      %p121 = scmp.ne.s32.totalorder %s112, %s113
      %p122 = scmp.eq.s32.totalorder %s27, 0
      %p123 = por %p121, %p122
      %p124 = scmp.ne.s32.totalorder %s112, %s113
      %p125 = scmp.eq.s32.totalorder %s28, 1
      %p126 = por %p124, %p125
      %p128 = scmp.ne.s32.totalorder %s113, %s127
      %p129 = scmp.eq.s32.totalorder %s28, 0
      %p130 = por %p128, %p129
      %s132 = sadd.s32 %s131, 1
      %p135 = scmp.eq.s32.totalorder %s22, 1
      %p136 = scmp.ne.s32.totalorder %s131, %s133
      %p137 = scmp.eq.s32.totalorder %s22, 0
      %p138 = por %p136, %p137
      %p139 = scmp.ne.s32.totalorder %s131, %s133
      %p140 = scmp.eq.s32.totalorder %s27, 1
      %p141 = por %p139, %p140
      %p142 = scmp.ne.s32.totalorder %s133, %s134
      %p143 = scmp.eq.s32.totalorder %s27, 0
      %p144 = por %p142, %p143
      %p145 = scmp.ne.s32.totalorder %s133, %s134
      %p146 = scmp.eq.s32.totalorder %s28, 1
      %p147 = por %p145, %p146
      %p149 = scmp.ne.s32.totalorder %s134, %s148
      %p150 = scmp.eq.s32.totalorder %s28, 0
      %p151 = por %p149, %p150
      %s153 = sadd.s32 %s152, 1
      %p156 = scmp.eq.s32.totalorder %s22, 1
      %p157 = scmp.ne.s32.totalorder %s152, %s154
      %p158 = scmp.eq.s32.totalorder %s22, 0
      %p159 = por %p157, %p158
      %p160 = scmp.ne.s32.totalorder %s152, %s154
      %p161 = scmp.eq.s32.totalorder %s27, 1
      %p162 = por %p160, %p161
      %p163 = scmp.ne.s32.totalorder %s154, %s155
      %p164 = scmp.eq.s32.totalorder %s27, 0
      %p165 = por %p163, %p164
      %p166 = scmp.ne.s32.totalorder %s154, %s155
      %p167 = scmp.eq.s32.totalorder %s28, 1
      %p168 = por %p166, %p167
      %p170 = scmp.ne.s32.totalorder %s155, %s169
      %p171 = scmp.eq.s32.totalorder %s28, 0
      %p172 = por %p170, %p171
      %s174 = sadd.s32 %s173, 1
      %p177 = scmp.eq.s32.totalorder %s22, 1
      %p178 = scmp.ne.s32.totalorder %s173, %s175
      %p179 = scmp.eq.s32.totalorder %s22, 0
      %p180 = por %p178, %p179
      %p181 = scmp.ne.s32.totalorder %s173, %s175
      %p182 = scmp.eq.s32.totalorder %s27, 1
      %p183 = por %p181, %p182
      %p184 = scmp.ne.s32.totalorder %s175, %s176
      %p185 = scmp.eq.s32.totalorder %s27, 0
      %p186 = por %p184, %p185
      %p187 = scmp.ne.s32.totalorder %s175, %s176
      %p188 = scmp.eq.s32.totalorder %s28, 1
      %p189 = por %p187, %p188
      %p191 = scmp.ne.s32.totalorder %s176, %s190
      %p192 = scmp.eq.s32.totalorder %s28, 0
      %p193 = por %p191, %p192
      %s195 = sadd.s32 %s194, 1
      %p198 = scmp.eq.s32.totalorder %s22, 1
      %p199 = scmp.ne.s32.totalorder %s194, %s196
      %p200 = scmp.eq.s32.totalorder %s22, 0
      %p201 = por %p199, %p200
      %p202 = scmp.ne.s32.totalorder %s194, %s196
      %p203 = scmp.eq.s32.totalorder %s27, 1
      %p204 = por %p202, %p203
      %p205 = scmp.ne.s32.totalorder %s196, %s197
      %p206 = scmp.eq.s32.totalorder %s27, 0
      %p207 = por %p205, %p206
      %p208 = scmp.ne.s32.totalorder %s196, %s197
      %p209 = scmp.eq.s32.totalorder %s28, 1
      %p210 = por %p208, %p209
      %p212 = scmp.ne.s32.totalorder %s197, %s211
      %p213 = scmp.eq.s32.totalorder %s28, 0
      %p214 = por %p212, %p213
      %s216 = sadd.s32 %s215, 1
      %p219 = scmp.eq.s32.totalorder %s22, 1
      %p220 = scmp.ne.s32.totalorder %s215, %s217
      %p221 = scmp.eq.s32.totalorder %s22, 0
      %p222 = por %p220, %p221
      %p223 = scmp.ne.s32.totalorder %s215, %s217
      %p224 = scmp.eq.s32.totalorder %s27, 1
      %p225 = por %p223, %p224
      %p226 = scmp.ne.s32.totalorder %s217, %s218
      %p227 = scmp.eq.s32.totalorder %s27, 0
      %p228 = por %p226, %p227
      %p229 = scmp.ne.s32.totalorder %s217, %s218
      %p230 = scmp.eq.s32.totalorder %s28, 1
      %p231 = por %p229, %p230
      %p233 = scmp.ne.s32.totalorder %s218, %s232
      %p234 = scmp.eq.s32.totalorder %s28, 0
      %p235 = por %p233, %p234
      %s237 = sadd.s32 %s236, 1
      %p240 = scmp.eq.s32.totalorder %s22, 1
      %p241 = scmp.ne.s32.totalorder %s236, %s238
      %p242 = scmp.eq.s32.totalorder %s22, 0
      %p243 = por %p241, %p242
      %p244 = scmp.ne.s32.totalorder %s236, %s238
      %p245 = scmp.eq.s32.totalorder %s27, 1
      %p246 = por %p244, %p245
      %p247 = scmp.ne.s32.totalorder %s238, %s239
      %p248 = scmp.eq.s32.totalorder %s27, 0
      %p249 = por %p247, %p248
      %p250 = scmp.ne.s32.totalorder %s238, %s239
      %p251 = scmp.eq.s32.totalorder %s28, 1
      %p252 = por %p250, %p251
      %p254 = scmp.ne.s32.totalorder %s239, %s253
      %p255 = scmp.eq.s32.totalorder %s28, 0
      %p256 = por %p254, %p255
      %s258 = sadd.s32 %s257, 1
      %p261 = scmp.eq.s32.totalorder %s22, 1
      %p262 = scmp.ne.s32.totalorder %s257, %s259
      %p263 = scmp.eq.s32.totalorder %s22, 0
      %p264 = por %p262, %p263
      %p265 = scmp.ne.s32.totalorder %s257, %s259
      %p266 = scmp.eq.s32.totalorder %s27, 1
      %p267 = por %p265, %p266
      %p268 = scmp.ne.s32.totalorder %s259, %s260
      %p269 = scmp.eq.s32.totalorder %s27, 0
      %p270 = por %p268, %p269
      %p271 = scmp.ne.s32.totalorder %s259, %s260
      %p272 = scmp.eq.s32.totalorder %s28, 1
      %p273 = por %p271, %p272
      %p275 = scmp.ne.s32.totalorder %s260, %s274
      %p276 = scmp.eq.s32.totalorder %s28, 0
      %p277 = por %p275, %p276
      %s279 = sadd.s32 %s278, 1
      %p282 = scmp.eq.s32.totalorder %s22, 1
      %p283 = scmp.ne.s32.totalorder %s278, %s280
      %p284 = scmp.eq.s32.totalorder %s22, 0
      %p285 = por %p283, %p284
      %p286 = scmp.ne.s32.totalorder %s278, %s280
      %p287 = scmp.eq.s32.totalorder %s27, 1
      %p288 = por %p286, %p287
      %p289 = scmp.ne.s32.totalorder %s280, %s281
      %p290 = scmp.eq.s32.totalorder %s27, 0
      %p291 = por %p289, %p290
      %p292 = scmp.ne.s32.totalorder %s280, %s281
      %p293 = scmp.eq.s32.totalorder %s28, 1
      %p294 = por %p292, %p293
      %p296 = scmp.ne.s32.totalorder %s281, %s295
      %p297 = scmp.eq.s32.totalorder %s28, 0
      %p298 = por %p296, %p297
      %s300 = sadd.s32 %s299, 1
      %p303 = scmp.eq.s32.totalorder %s22, 1
      %p304 = scmp.ne.s32.totalorder %s299, %s301
      %p305 = scmp.eq.s32.totalorder %s22, 0
      %p306 = por %p304, %p305
      %p307 = scmp.ne.s32.totalorder %s299, %s301
      %p308 = scmp.eq.s32.totalorder %s27, 1
      %p309 = por %p307, %p308
      %p310 = scmp.ne.s32.totalorder %s301, %s302
      %p311 = scmp.eq.s32.totalorder %s27, 0
      %p312 = por %p310, %p311
      %p313 = scmp.ne.s32.totalorder %s301, %s302
      %p314 = scmp.eq.s32.totalorder %s28, 1
      %p315 = por %p313, %p314
      %p317 = scmp.ne.s32.totalorder %s302, %s316
      %p318 = scmp.eq.s32.totalorder %s28, 0
      %p319 = por %p317, %p318
      %s320 = smul.u32 %s30, %s29
      %s321 = smul.u32 %s37, %s41
      %s322 = ssub.s32 %s320, %s321
      %p323 = scmp.eq.s32.totalorder %s322, 0
      %s325 = sadd.s32 %s324, 1
      %s326 = scalar_select %p323, %s324, %s325
      %p329 = pneg %p323
      %p330 = scmp.eq.s32.totalorder %s22, 1
      %p331 = por %p329, %p330
      %p332 = scmp.ne.s32.totalorder %s324, %s327
      %p333 = scmp.eq.s32.totalorder %s22, 0
      %p334 = por %p332, %p333
      %p335 = scmp.ne.s32.totalorder %s324, %s327
      %p336 = scmp.eq.s32.totalorder %s27, 1
      %p337 = por %p335, %p336
      %p338 = scmp.ne.s32.totalorder %s327, %s328
      %p339 = scmp.eq.s32.totalorder %s27, 0
      %p340 = por %p338, %p339
      %p341 = scmp.ne.s32.totalorder %s327, %s328
      %p342 = scmp.eq.s32.totalorder %s28, 1
      %p343 = por %p341, %p342
      %p345 = scmp.ne.s32.totalorder %s328, %s344
      %p346 = scmp.eq.s32.totalorder %s28, 0
      %p347 = por %p345, %p346
      %p348 = scmp.le.s32.totalorder 1, %s22
      %p349 = scmp.lt.s32.totalorder %s22, 3
      %p350 = pnand %p348, %p349
      %p351 = pneg %p350
      // Predicated region
      $region9: #{conv_module_forward.1} parent=5 // pred_check
        _
      $region10: #{conv_module_forward.1} parent=5 // pred_check_branch
        %353 = sbr.rel (%p350) target = $region12
      $region11: #{conv_module_forward.1} parent=5 // pred_region
        %s354 = ssub.s32 %s22, 1
        // Predicated region
        $region13: #{conv_module_forward.1} parent=11 // pred_check
          %p355 = pneg %p60
        $region14: #{conv_module_forward.1} parent=11 // pred_check_branch
          %357 = sbr.rel (%p355) target = $region16
        $region15: #{conv_module_forward.1} parent=11 // pred_region
          %s358 = smul.u32 2, %s32
          %p359 = scmp.lt.s32.totalorder %s358, 1
          %s360 = scalar_select %p359, %s358, 1
          %s361 = smul.addr %s360, 2
          %s362 = smul.addr %s361, 8
          %s363 = scalar_lea.vmem %s0, %s362
          %s364 = smul.u32 2, %s32
        $region16: #{conv_module_forward.1} parent=11 // pred_fallthru
          _
        // Predicated region
        $region17: #{conv_module_forward.1} parent=11 // pred_check
          %p365 = pneg %p81
        $region18: #{conv_module_forward.1} parent=11 // pred_check_branch
          %367 = sbr.rel (%p365) target = $region20
        $region19: #{conv_module_forward.1} parent=11 // pred_region
          _
        $region20: #{conv_module_forward.1} parent=11 // pred_fallthru
          _
        // Predicated region
        $region21: #{conv_module_forward.1} parent=11 // pred_check
          %p368 = pneg %p102
        $region22: #{conv_module_forward.1} parent=11 // pred_check_branch
          %370 = sbr.rel (%p368) target = $region24
        $region23: #{conv_module_forward.1} parent=11 // pred_region
          _
        $region24: #{conv_module_forward.1} parent=11 // pred_fallthru
          _
        // Predicated region
        $region25: #{conv_module_forward.1} parent=11 // pred_check
          %p371 = pneg %p123
        $region26: #{conv_module_forward.1} parent=11 // pred_check_branch
          %373 = sbr.rel (%p371) target = $region28
        $region27: #{conv_module_forward.1} parent=11 // pred_region
          _
        $region28: #{conv_module_forward.1} parent=11 // pred_fallthru
          _
        // Predicated region
        $region29: #{conv_module_forward.1} parent=11 // pred_check
          %p374 = pneg %p144
        $region30: #{conv_module_forward.1} parent=11 // pred_check_branch
          %376 = sbr.rel (%p374) target = $region32
        $region31: #{conv_module_forward.1} parent=11 // pred_region
          _
        $region32: #{conv_module_forward.1} parent=11 // pred_fallthru
          _
        // Predicated region
        $region33: #{conv_module_forward.1} parent=11 // pred_check
          %p377 = pneg %p165
        $region34: #{conv_module_forward.1} parent=11 // pred_check_branch
          %379 = sbr.rel (%p377) target = $region36
        $region35: #{conv_module_forward.1} parent=11 // pred_region
          _
        $region36: #{conv_module_forward.1} parent=11 // pred_fallthru
          _
        // Predicated region
        $region37: #{conv_module_forward.1} parent=11 // pred_check
          %p380 = pneg %p186
        $region38: #{conv_module_forward.1} parent=11 // pred_check_branch
          %382 = sbr.rel (%p380) target = $region40
        $region39: #{conv_module_forward.1} parent=11 // pred_region
          _
        $region40: #{conv_module_forward.1} parent=11 // pred_fallthru
          _
        // Predicated region
        $region41: #{conv_module_forward.1} parent=11 // pred_check
          %p383 = pneg %p207
        $region42: #{conv_module_forward.1} parent=11 // pred_check_branch
          %385 = sbr.rel (%p383) target = $region44
        $region43: #{conv_module_forward.1} parent=11 // pred_region
          _
        $region44: #{conv_module_forward.1} parent=11 // pred_fallthru
          _
        // Predicated region
        $region45: #{conv_module_forward.1} parent=11 // pred_check
          %p386 = pneg %p228
        $region46: #{conv_module_forward.1} parent=11 // pred_check_branch
          %388 = sbr.rel (%p386) target = $region48
        $region47: #{conv_module_forward.1} parent=11 // pred_region
          _
        $region48: #{conv_module_forward.1} parent=11 // pred_fallthru
          _
        // Predicated region
        $region49: #{conv_module_forward.1} parent=11 // pred_check
          %p389 = pneg %p249
        $region50: #{conv_module_forward.1} parent=11 // pred_check_branch
          %391 = sbr.rel (%p389) target = $region52
        $region51: #{conv_module_forward.1} parent=11 // pred_region
          _
        $region52: #{conv_module_forward.1} parent=11 // pred_fallthru
          _
        // Predicated region
        $region53: #{conv_module_forward.1} parent=11 // pred_check
          %p392 = pneg %p270
        $region54: #{conv_module_forward.1} parent=11 // pred_check_branch
          %394 = sbr.rel (%p392) target = $region56
        $region55: #{conv_module_forward.1} parent=11 // pred_region
          _
        $region56: #{conv_module_forward.1} parent=11 // pred_fallthru
          _
        // Predicated region
        $region57: #{conv_module_forward.1} parent=11 // pred_check
          %p395 = pneg %p291
        $region58: #{conv_module_forward.1} parent=11 // pred_check_branch
          %397 = sbr.rel (%p395) target = $region60
        $region59: #{conv_module_forward.1} parent=11 // pred_region
          _
        $region60: #{conv_module_forward.1} parent=11 // pred_fallthru
          _
        // Predicated region
        $region61: #{conv_module_forward.1} parent=11 // pred_check
          %p398 = pneg %p312
        $region62: #{conv_module_forward.1} parent=11 // pred_check_branch
          %400 = sbr.rel (%p398) target = $region64
        $region63: #{conv_module_forward.1} parent=11 // pred_region
          _
        $region64: #{conv_module_forward.1} parent=11 // pred_fallthru
          _
      $region12: #{conv_module_forward.1} parent=5 // pred_fallthru
        _
      %p401 = scmp.lt.s32.totalorder %s22, 2
      // Predicated region
      $region65: #{conv_module_forward.1} parent=5 // pred_check
        %p402 = pneg %p401
      $region66: #{conv_module_forward.1} parent=5 // pred_check_branch
        %404 = sbr.rel (%p402) target = $region68
      $region67: #{conv_module_forward.1} parent=5 // pred_region
        _
      $region68: #{conv_module_forward.1} parent=5 // pred_fallthru
        _
      %p405 = scmp.le.s32.totalorder 1, %s22
      %p406 = scmp.lt.s32.totalorder %s22, 3
      %p407 = pnand %p405, %p406
      %p408 = pneg %p407
      // Predicated region
      $region69: #{conv_module_forward.1} parent=5 // pred_check
        _
      $region70: #{conv_module_forward.1} parent=5 // pred_check_branch
        %410 = sbr.rel (%p407) target = $region72
      $region71: #{conv_module_forward.1} parent=5 // pred_region
        %s411 = ssub.s32 %s22, 1
        %s412 = smul.u32 2, %s32
        %p413 = scmp.lt.s32.totalorder %s412, 1
        %s414 = scalar_select %p413, %s412, 1
        %s415 = smul.addr %s414, 2
        %s416 = smul.addr %s415, 8
        %s417 = scalar_lea.vmem %s0, %s416
        %p418 = pneg %p60
        %p419 = pneg %p57
        %p420 = pneg %p81
        %p421 = pneg %p78
        %p422 = pneg %p102
        %p423 = pneg %p99
        %p424 = pneg %p123
        %p425 = pneg %p120
        %p426 = pneg %p144
        %p427 = pneg %p141
        %p428 = pneg %p165
        %p429 = pneg %p162
        %p430 = pneg %p186
        %p431 = pneg %p183
        %p432 = pneg %p207
        %p433 = pneg %p204
        %p434 = pneg %p228
        %p435 = pneg %p225
        %p436 = pneg %p249
        %p437 = pneg %p246
        %p438 = pneg %p270
        %p439 = pneg %p267
        %p440 = pneg %p291
        %p441 = pneg %p288
        %p442 = pneg %p312
        %p443 = pneg %p309
        %p444 = pneg %p340
        %p445 = pneg %p337
        %s446 = sand.u32 %s327, 1
        %s447 = scalar_lea.sflag [#allocation7], %s446
        %s448 = sand.u32 %s327, 1
        %s449 = smul.addr %s448, 32
        %s450 = scalar_lea.vmem [#allocation6], %s449
        %s451 = smul.u32 2, %s32
        %p452 = scmp.lt.s32.totalorder %s451, 1
        %s453 = scalar_select %p452, %s451, 1
        %s454 = smul.addr %s453, 2
        %s455 = smul.addr %s454, 8
        %s456 = scalar_lea.vmem %s0, %s455
        %s457 = smul.u32 2, %s32
        %s458 = smul.u32 %s32, %s31
        %s459 = smul.u32 2, %s458
        %s461 = smul.u32 %s32, 2
        %p462 = scmp.eq.s32.totalorder %s31, 0
        // Predicated region
        $region73: #{conv_module_forward.1} parent=71 // pred_check
          %p463 = pneg %p462
        $region74: #{conv_module_forward.1} parent=71 // pred_check_branch
          %465 = sbr.rel (%p463) target = $region76
        $region75: #{conv_module_forward.1} parent=71 // pred_region
          %p466 = scmp.eq.s32.totalorder %s32, 0
          // Predicated region
          $region77: #{conv_module_forward.1} parent=75 // pred_check
            %p467 = pneg %p466
          $region78: #{conv_module_forward.1} parent=75 // pred_check_branch
            %469 = sbr.rel (%p467) target = $region80
          $region79: #{conv_module_forward.1} parent=75 // pred_region
            %vm470 = vcmask 254976
            %471 = vst.msk [vmem:[#allocation4] sm:$0x3] %vm470, 0.0
          $region80: #{conv_module_forward.1} parent=75 // pred_fallthru
            _
          %v472 = vld [vmem:[%s456] sm:$0xff]
          %v473 = vld [vmem:[%s456 + $0x8] sm:$0xff]
          %v474 = vld [vmem:[%s456 + $0x10] sm:$0xff]
          %v475 = vld [vmem:[%s456 + $0x18] sm:$0xff]
          %v476 = vld [vmem:[%s1] sm:$0x1]
          %v477 = vld [vmem:[%s2] sm:$0x1]
          %v478 = vld [vmem:[%s3] sm:$0xf]
          %v479 = vld [vmem:[%s3 + $0x4] sm:$0xf]
          %v480 = vld [vmem:[%s3 + $0x8] sm:$0xf]
          %v481 = vld [vmem:[%s3 + $0xc] sm:$0xf]
          %v482 = vld [vmem:[%s4] sm:$0x1]
          %v483 = vld [vmem:[%s5] sm:$0xf]
          %v484 = vld [vmem:[%s5 + $0x4] sm:$0xf]
          %v485 = vld [vmem:[%s5 + $0x8] sm:$0xf]
          %v486 = vld [vmem:[%s5 + $0xc] sm:$0xf]
          %v487 = vld [vmem:[%s6] sm:$0x1]
          %v488 = vld [vmem:[%s7] sm:$0xff]
          %v489 = vld [vmem:[%s8] sm:$0x1]
          %vm490 = vcmask 261120
          %v491 = vsel %vm490, %v472, 0.0
          %492 = vadd.xlane.f32.xlu0 %v491
          %v493 = vpop.xlane.xlu0 %492
          %v494 = vsel %vm490, %v473, 0.0
          %495 = vadd.xlane.f32.xlu0 %v494
          %v496 = vpop.xlane.xlu0 %495
          %v497 = vsel %vm490, %v474, 0.0
          %498 = vadd.xlane.f32.xlu0 %v497
          %v499 = vpop.xlane.xlu0 %498
          %v500 = vsel %vm490, %v475, 0.0
          %501 = vadd.xlane.f32.xlu0 %v500
          %v502 = vpop.xlane.xlu0 %501
          %v503 = vrcp.pop 32.0
          %v504 = vmul.f32 32.0, %v503
          %v505 = vsub.f32 1.0, %v504
          %v506 = vmul.f32 %v503, %v505
          %v507 = vadd.f32 %v503, %v506
          %vm508 = vweird.f32 %v503
          %v509 = vsel %vm508, %v503, %v507
          %v510 = vmul.f32 %v493, %v509
          %v511 = vmul.f32 %v496, %v509
          %v512 = vmul.f32 %v499, %v509
          %v513 = vmul.f32 %v502, %v509
          %v514 = vsub.f32 %v472, %v510
          %v515 = vsub.f32 %v473, %v511
          %v516 = vsub.f32 %v474, %v512
          %v517 = vsub.f32 %v475, %v513
          %v518 = vmul.f32 %v514, %v514
          %v519 = vmul.f32 %v515, %v515
          %v520 = vmul.f32 %v516, %v516
          %v521 = vmul.f32 %v517, %v517
          %v522 = vsel %vm490, %v518, 0.0
          %523 = vadd.xlane.f32.xlu0 %v522
          %v524 = vpop.xlane.xlu0 %523
          %v525 = vsel %vm490, %v519, 0.0
          %526 = vadd.xlane.f32.xlu0 %v525
          %v527 = vpop.xlane.xlu0 %526
          %v528 = vsel %vm490, %v520, 0.0
          %529 = vadd.xlane.f32.xlu0 %v528
          %v530 = vpop.xlane.xlu0 %529
          %v531 = vsel %vm490, %v521, 0.0
          %532 = vadd.xlane.f32.xlu0 %v531
          %v533 = vpop.xlane.xlu0 %532
          %v534 = vmul.f32 %v524, %v509
          %v535 = vmul.f32 %v527, %v509
          %v536 = vmul.f32 %v530, %v509
          %v537 = vmul.f32 %v533, %v509
          %v538 = vadd.f32 %v534, 1e-05
          %v539 = vadd.f32 %v535, 1e-05
          %v540 = vadd.f32 %v536, 1e-05
          %v541 = vadd.f32 %v537, 1e-05
          %v542 = vrsqrt.pop %v538
          %v543 = vmul.f32 %v542, %v538
          %v544 = vmul.f32 %v543, %v542
          %v545 = vmul.f32 0.5, %v544
          %v546 = vsub.f32 1.5, %v545
          %v547 = vmul.f32 %v542, %v546
          %vm548 = vweird.f32 %v538
          %vm549 = vweird.f32 %v542
          %vm550 = vmor %vm548, %vm549
          %v551 = vsel %vm550, %v542, %v547
          %v552 = vrsqrt.pop %v539
          %v553 = vmul.f32 %v552, %v539
          %v554 = vmul.f32 %v553, %v552
          %v555 = vmul.f32 0.5, %v554
          %v556 = vsub.f32 1.5, %v555
          %v557 = vmul.f32 %v552, %v556
          %vm558 = vweird.f32 %v539
          %vm559 = vweird.f32 %v552
          %vm560 = vmor %vm558, %vm559
          %v561 = vsel %vm560, %v552, %v557
          %v562 = vrsqrt.pop %v540
          %v563 = vmul.f32 %v562, %v540
          %v564 = vmul.f32 %v563, %v562
          %v565 = vmul.f32 0.5, %v564
          %v566 = vsub.f32 1.5, %v565
          %v567 = vmul.f32 %v562, %v566
          %vm568 = vweird.f32 %v540
          %vm569 = vweird.f32 %v562
          %vm570 = vmor %vm568, %vm569
          %v571 = vsel %vm570, %v562, %v567
          %v572 = vrsqrt.pop %v541
          %v573 = vmul.f32 %v572, %v541
          %v574 = vmul.f32 %v573, %v572
          %v575 = vmul.f32 0.5, %v574
          %v576 = vsub.f32 1.5, %v575
          %v577 = vmul.f32 %v572, %v576
          %vm578 = vweird.f32 %v541
          %vm579 = vweird.f32 %v572
          %vm580 = vmor %vm578, %vm579
          %v581 = vsel %vm580, %v572, %v577
          %v582 = vmul.f32 %v514, %v551
          %v583 = vmul.f32 %v515, %v561
          %v584 = vmul.f32 %v516, %v571
          %v585 = vmul.f32 %v517, %v581
          %v587 = vperm.slane %v476, 0
          %v589 = vmul.f32 %v582, %v587
          %v590 = vmul.f32 %v583, %v587
          %v591 = vmul.f32 %v584, %v587
          %v592 = vmul.f32 %v585, %v587
          %v594 = vperm.slane %v477, 0
          %v596 = vadd.f32 %v589, %v594
          %v597 = vadd.f32 %v590, %v594
          %v598 = vadd.f32 %v591, %v594
          %v599 = vadd.f32 %v592, %v594
          %v600 = vpack.c.bf16 %v597, %v596
          %v601 = vpack.c.bf16 %v599, %v598
          %v603 = vperm.slane %v482, 0
          %v609 = vunpack.c.l.b16 %v478
          %v610 = vunpack.c.l.b16 %v479
          %v611 = vunpack.c.l.b16 %v480
          %v612 = vunpack.c.l.b16 %v481
          %v613 = vpack.c.b16 %v610, %v609
          %v614 = vpack.c.b16 %v612, %v611
          %v618 = vsel %vm490, %v600, 0
          %v621 = vsel %vm490, %v601, 0
          %623 = vmatpush.bf16.msra.mxu0 0
          %624 = vmatpush.bf16.msra.mxu0 0
          %625 = vmatpush.bf16.msra.mxu0 0
          %626 = vmatpush.bf16.msra.mxu0 0
          %627 = vmatpush.bf16.msra.mxu0 0
          %628 = vmatpush.bf16.msra.mxu0 0
          %629 = vmatpush.bf16.msra.mxu0 %v614
          %630 = vmatpush.bf16.msra.mxu0 %v613
          %631 = vmatmul.bf16.gmra.mxu0 %v618
          %v632 = vpop.f32.mrf.mxu0
          %v633 = vadd.f32 %v603, %v632
          %v634 = vpop.f32.mrf.mxu0
          %v635 = vadd.f32 %v603, %v634
          %636 = vmatmul.bf16.gmra.mxu0 %v621
          %v637 = vpop.f32.mrf.mxu0
          %v638 = vadd.f32 %v603, %v637
          %v639 = vpop.f32.mrf.mxu0
          %v640 = vadd.f32 %v603, %v639
          %641 = vdwg.mxu0
          %v643 = vperm.slane %v487, 0
          %v649 = vunpack.c.l.b16 %v483
          %v650 = vunpack.c.l.b16 %v484
          %v651 = vunpack.c.l.b16 %v485
          %v652 = vunpack.c.l.b16 %v486
          %v653 = vpack.c.b16 %v650, %v649
          %v654 = vpack.c.b16 %v652, %v651
          %657 = vmatpush.bf16.msra.mxu0 0
          %658 = vmatpush.bf16.msra.mxu0 0
          %659 = vmatpush.bf16.msra.mxu0 0
          %660 = vmatpush.bf16.msra.mxu0 0
          %661 = vmatpush.bf16.msra.mxu0 0
          %662 = vmatpush.bf16.msra.mxu0 0
          %663 = vmatpush.bf16.msra.mxu0 %v654
          %664 = vmatpush.bf16.msra.mxu0 %v653
          %665 = vmatmul.bf16.gmra.mxu0 %v618
          %v666 = vpop.f32.mrf.mxu0
          %v667 = vadd.f32 %v643, %v666
          %v668 = vpop.f32.mrf.mxu0
          %v669 = vadd.f32 %v643, %v668
          %670 = vmatmul.bf16.gmra.mxu0 %v621
          %v671 = vpop.f32.mrf.mxu0
          %v672 = vadd.f32 %v643, %v671
          %v673 = vpop.f32.mrf.mxu0
          %v674 = vadd.f32 %v643, %v673
          %675 = vdwg.mxu0
          %v676 = vxor.u32 %v667, 2147483648
          %v677 = vxor.u32 %v669, 2147483648
          %v678 = vxor.u32 %v672, 2147483648
          %v679 = vxor.u32 %v674, 2147483648
          %v680 = vmul.f32 %v676, 1.442695
          %v681 = vpow.pop %v680
          %v682 = vmul.f32 %v677, 1.442695
          %v683 = vpow.pop %v682
          %v684 = vmul.f32 %v678, 1.442695
          %v685 = vpow.pop %v684
          %v686 = vmul.f32 %v679, 1.442695
          %v687 = vpow.pop %v686
          %v688 = vadd.f32 %v681, 1.0
          %v689 = vadd.f32 %v683, 1.0
          %v690 = vadd.f32 %v685, 1.0
          %v691 = vadd.f32 %v687, 1.0
          %v692 = vrcp.pop %v688
          %v693 = vmul.f32 %v688, %v692
          %v694 = vsub.f32 1.0, %v693
          %v695 = vmul.f32 %v692, %v694
          %v696 = vadd.f32 %v692, %v695
          %vm697 = vweird.f32 %v688
          %vm698 = vweird.f32 %v692
          %vm699 = vmor %vm697, %vm698
          %v700 = vsel %vm699, %v692, %v696
          %v701 = vand.u32 2147483647, %v688
          %vm702 = vcmp.eq.f32.partialorder %v701, 8.507059e+37
          %v703 = vand.u32 %v688, 2147483648
          %v704 = vor.u32 1.1754944e-38, %v703
          %v705 = vsel %vm702, %v704, %v700
          %v706 = vmul.f32 1.0, %v705
          %v707 = vrcp.pop %v689
          %v708 = vmul.f32 %v689, %v707
          %v709 = vsub.f32 1.0, %v708
          %v710 = vmul.f32 %v707, %v709
          %v711 = vadd.f32 %v707, %v710
          %vm712 = vweird.f32 %v689
          %vm713 = vweird.f32 %v707
          %vm714 = vmor %vm712, %vm713
          %v715 = vsel %vm714, %v707, %v711
          %v716 = vand.u32 2147483647, %v689
          %vm717 = vcmp.eq.f32.partialorder %v716, 8.507059e+37
          %v718 = vand.u32 %v689, 2147483648
          %v719 = vor.u32 1.1754944e-38, %v718
          %v720 = vsel %vm717, %v719, %v715
          %v721 = vmul.f32 1.0, %v720
          %v722 = vrcp.pop %v690
          %v723 = vmul.f32 %v690, %v722
          %v724 = vsub.f32 1.0, %v723
          %v725 = vmul.f32 %v722, %v724
          %v726 = vadd.f32 %v722, %v725
          %vm727 = vweird.f32 %v690
          %vm728 = vweird.f32 %v722
          %vm729 = vmor %vm727, %vm728
          %v730 = vsel %vm729, %v722, %v726
          %v731 = vand.u32 2147483647, %v690
          %vm732 = vcmp.eq.f32.partialorder %v731, 8.507059e+37
          %v733 = vand.u32 %v690, 2147483648
          %v734 = vor.u32 1.1754944e-38, %v733
          %v735 = vsel %vm732, %v734, %v730
          %v736 = vmul.f32 1.0, %v735
          %v737 = vrcp.pop %v691
          %v738 = vmul.f32 %v691, %v737
          %v739 = vsub.f32 1.0, %v738
          %v740 = vmul.f32 %v737, %v739
          %v741 = vadd.f32 %v737, %v740
          %vm742 = vweird.f32 %v691
          %vm743 = vweird.f32 %v737
          %vm744 = vmor %vm742, %vm743
          %v745 = vsel %vm744, %v737, %v741
          %v746 = vand.u32 2147483647, %v691
          %vm747 = vcmp.eq.f32.partialorder %v746, 8.507059e+37
          %v748 = vand.u32 %v691, 2147483648
          %v749 = vor.u32 1.1754944e-38, %v748
          %v750 = vsel %vm747, %v749, %v745
          %v751 = vmul.f32 1.0, %v750
          %v752 = vmul.f32 %v633, %v706
          %v753 = vmul.f32 %v635, %v721
          %v754 = vmul.f32 %v638, %v736
          %v755 = vmul.f32 %v640, %v751
          %vm756 = vcmask 256000
          %757 = vst.msk [vmem:[#allocation2] sm:$0x7] %vm756, 0.0
          %758 = vst.msk [vmem:[#allocation2 + $0x18] sm:$0x7] %vm756, 0.0
          %vm759 = vcmask 257024
          %760 = vst.msk [vmem:[#allocation2 + $0x13] sm:$0xf] %vm759, 0.0
          %761 = vst.msk [vmem:[#allocation2 + $0x2b] sm:$0xf] %vm759, 0.0
          %762 = vst.msk [vmem:[#allocation2 + $0x3] sm:$0xff] %vm490, %v752
          %763 = vst.msk [vmem:[#allocation2 + $0xb] sm:$0xff] %vm490, %v753
          %764 = vst.msk [vmem:[#allocation2 + $0x1b] sm:$0xff] %vm490, %v754
          %765 = vst.msk [vmem:[#allocation2 + $0x23] sm:$0xff] %vm490, %v755
          %v766 = vld [vmem:[#allocation2] sm:$0xff]
          %v767 = vld [vmem:[#allocation2 + $0x8] sm:$0xff]
          %v768 = vld [vmem:[#allocation2 + $0x18] sm:$0xff]
          %v769 = vld [vmem:[#allocation2 + $0x20] sm:$0xff]
          %v770 = vperm.slane %v488, 0
          %v771 = vmul.f32 %v770, %v766
          %v772 = vmul.f32 %v770, %v767
          %v773 = vmul.f32 %v770, %v768
          %v774 = vmul.f32 %v770, %v769
          %v775 = vadd.f32 %v771, 0.0
          %v776 = vadd.f32 %v772, 0.0
          %v777 = vadd.f32 %v773, 0.0
          %v778 = vadd.f32 %v774, 0.0
          %v779 = vld [vmem:[#allocation2 + $0x1] sm:$0xff]
          %v780 = vld [vmem:[#allocation2 + $0x9] sm:$0xff]
          %v781 = vld [vmem:[#allocation2 + $0x19] sm:$0xff]
          %v782 = vld [vmem:[#allocation2 + $0x21] sm:$0xff]
          %v783 = vperm.slane %v488, 1
          %v784 = vmul.f32 %v783, %v779
          %v785 = vmul.f32 %v783, %v780
          %v786 = vmul.f32 %v783, %v781
          %v787 = vmul.f32 %v783, %v782
          %v788 = vadd.f32 %v775, %v784
          %v789 = vadd.f32 %v776, %v785
          %v790 = vadd.f32 %v777, %v786
          %v791 = vadd.f32 %v778, %v787
          %v792 = vld [vmem:[#allocation2 + $0x2] sm:$0xff]
          %v793 = vld [vmem:[#allocation2 + $0xa] sm:$0xff]
          %v794 = vld [vmem:[#allocation2 + $0x1a] sm:$0xff]
          %v795 = vld [vmem:[#allocation2 + $0x22] sm:$0xff]
          %v796 = vperm.slane %v488, 2
          %v797 = vmul.f32 %v796, %v792
          %v798 = vmul.f32 %v796, %v793
          %v799 = vmul.f32 %v796, %v794
          %v800 = vmul.f32 %v796, %v795
          %v801 = vadd.f32 %v788, %v797
          %v802 = vadd.f32 %v789, %v798
          %v803 = vadd.f32 %v790, %v799
          %v804 = vadd.f32 %v791, %v800
          %v805 = vld [vmem:[#allocation2 + $0x3] sm:$0xff]
          %v806 = vld [vmem:[#allocation2 + $0xb] sm:$0xff]
          %v807 = vld [vmem:[#allocation2 + $0x1b] sm:$0xff]
          %v808 = vld [vmem:[#allocation2 + $0x23] sm:$0xff]
          %v809 = vperm.slane %v488, 3
          %v810 = vmul.f32 %v809, %v805
          %v811 = vmul.f32 %v809, %v806
          %v812 = vmul.f32 %v809, %v807
          %v813 = vmul.f32 %v809, %v808
          %v814 = vadd.f32 %v801, %v810
          %v815 = vadd.f32 %v802, %v811
          %v816 = vadd.f32 %v803, %v812
          %v817 = vadd.f32 %v804, %v813
          %v818 = vld [vmem:[#allocation2 + $0x4] sm:$0xff]
          %v819 = vld [vmem:[#allocation2 + $0xc] sm:$0xff]
          %v820 = vld [vmem:[#allocation2 + $0x1c] sm:$0xff]
          %v821 = vld [vmem:[#allocation2 + $0x24] sm:$0xff]
          %v822 = vperm.slane %v488, 4
          %v823 = vmul.f32 %v822, %v818
          %v824 = vmul.f32 %v822, %v819
          %v825 = vmul.f32 %v822, %v820
          %v826 = vmul.f32 %v822, %v821
          %v827 = vadd.f32 %v814, %v823
          %v828 = vadd.f32 %v815, %v824
          %v829 = vadd.f32 %v816, %v825
          %v830 = vadd.f32 %v817, %v826
          %v831 = vld [vmem:[#allocation2 + $0x5] sm:$0xff]
          %v832 = vld [vmem:[#allocation2 + $0xd] sm:$0xff]
          %v833 = vld [vmem:[#allocation2 + $0x1d] sm:$0xff]
          %v834 = vld [vmem:[#allocation2 + $0x25] sm:$0xff]
          %v835 = vperm.slane %v488, 5
          %v836 = vmul.f32 %v835, %v831
          %v837 = vmul.f32 %v835, %v832
          %v838 = vmul.f32 %v835, %v833
          %v839 = vmul.f32 %v835, %v834
          %v840 = vadd.f32 %v827, %v836
          %v841 = vadd.f32 %v828, %v837
          %v842 = vadd.f32 %v829, %v838
          %v843 = vadd.f32 %v830, %v839
          %v844 = vld [vmem:[#allocation2 + $0x6] sm:$0xff]
          %v845 = vld [vmem:[#allocation2 + $0xe] sm:$0xff]
          %v846 = vld [vmem:[#allocation2 + $0x1e] sm:$0xff]
          %v847 = vld [vmem:[#allocation2 + $0x26] sm:$0xff]
          %v848 = vperm.slane %v488, 6
          %v849 = vmul.f32 %v848, %v844
          %v850 = vmul.f32 %v848, %v845
          %v851 = vmul.f32 %v848, %v846
          %v852 = vmul.f32 %v848, %v847
          %v853 = vadd.f32 %v840, %v849
          %v854 = vadd.f32 %v841, %v850
          %v855 = vadd.f32 %v842, %v851
          %v856 = vadd.f32 %v843, %v852
          %v857 = vld [vmem:[#allocation2 + $0x7] sm:$0xff]
          %v858 = vld [vmem:[#allocation2 + $0xf] sm:$0xff]
          %v859 = vld [vmem:[#allocation2 + $0x1f] sm:$0xff]
          %v860 = vld [vmem:[#allocation2 + $0x27] sm:$0xff]
          %v861 = vperm.slane %v488, 7
          %v862 = vmul.f32 %v861, %v857
          %v863 = vmul.f32 %v861, %v858
          %v864 = vmul.f32 %v861, %v859
          %v865 = vmul.f32 %v861, %v860
          %v866 = vadd.f32 %v853, %v862
          %v867 = vadd.f32 %v854, %v863
          %v868 = vadd.f32 %v855, %v864
          %v869 = vadd.f32 %v856, %v865
          %v871 = vperm.slane %v489, 0
          %v873 = vadd.f32 %v866, %v871
          %v874 = vadd.f32 %v867, %v871
          %v875 = vadd.f32 %v868, %v871
          %v876 = vadd.f32 %v869, %v871
          %s877 = smul.u32 %s461, 16
          %s878 = scalar_lea.vmem [#allocation3], %s877
          %879 = vst.msk [vmem:[%s878] sm:$0xff] %vm490, %v873
          %880 = vst.msk [vmem:[%s878 + $0x8] sm:$0xff] %vm490, %v874
          %881 = vst.msk [vmem:[%s878 + $0x10] sm:$0xff] %vm490, %v875
          %882 = vst.msk [vmem:[%s878 + $0x18] sm:$0xff] %vm490, %v876
          %v883 = vld [vmem:[#allocation4] sm:$0x1]
          %v884 = vsel %vm490, %v873, 0.0
          %v885 = vsel %vm490, %v874, 0.0
          %v886 = vadd.f32 %v884, %v885
          %v887 = vsel %vm490, %v875, 0.0
          %v888 = vadd.f32 %v886, %v887
          %v889 = vsel %vm490, %v876, 0.0
          %v890 = vadd.f32 %v888, %v889
          %v891 = vrot.slane %v890, 4
          %v892 = vadd.f32 %v890, %v891
          %v893 = vrot.slane %v892, 2
          %v894 = vadd.f32 %v892, %v893
          %v895 = vrot.slane %v894, 1
          %v896 = vadd.f32 %v894, %v895
          %v897 = vadd.f32 %v883, %v896
          %vm898 = vcmask 253952
          %899 = vst.msk [vmem:[#allocation4] sm:$0x1] %vm898, %v897
          %v900 = vld [vmem:[#allocation4 + $0x1] sm:$0x1]
          %v901 = vmul.f32 %v873, %v873
          %v902 = vmul.f32 %v874, %v874
          %v903 = vmul.f32 %v875, %v875
          %v904 = vmul.f32 %v876, %v876
          %v905 = vsel %vm490, %v901, 0.0
          %v906 = vsel %vm490, %v902, 0.0
          %v907 = vadd.f32 %v905, %v906
          %v908 = vsel %vm490, %v903, 0.0
          %v909 = vadd.f32 %v907, %v908
          %v910 = vsel %vm490, %v904, 0.0
          %v911 = vadd.f32 %v909, %v910
          %v912 = vrot.slane %v911, 4
          %v913 = vadd.f32 %v911, %v912
          %v914 = vrot.slane %v913, 2
          %v915 = vadd.f32 %v913, %v914
          %v916 = vrot.slane %v915, 1
          %v917 = vadd.f32 %v915, %v916
          %v918 = vadd.f32 %v900, %v917
          %919 = vst.msk [vmem:[#allocation4 + $0x1] sm:$0x1] %vm898, %v918
        $region76: #{conv_module_forward.1} parent=71 // pred_fallthru
          _
        %p920 = scmp.eq.s32.totalorder %s31, 1
        // Predicated region
        $region81: #{conv_module_forward.1} parent=71 // pred_check
          %p921 = pneg %p920
        $region82: #{conv_module_forward.1} parent=71 // pred_check_branch
          %923 = sbr.rel (%p921) target = $region84
        $region83: #{conv_module_forward.1} parent=71 // pred_region
          %p924 = scmp.eq.s32.totalorder %s32, 0
          // Predicated region
          $region85: #{conv_module_forward.1} parent=83 // pred_check
            %p925 = pneg %p924
          $region86: #{conv_module_forward.1} parent=83 // pred_check_branch
            %927 = sbr.rel (%p925) target = $region88
          $region87: #{conv_module_forward.1} parent=83 // pred_region
            %v928 = vld [vmem:[#allocation4] sm:$0x1]
            %v929 = vmul.f32 %v928, 0.03125
            %v930 = vld [vmem:[#allocation4 + $0x1] sm:$0x1]
            %v931 = vmul.f32 %v930, 0.03125
            %v932 = vmul.f32 %v929, %v929
            %v933 = vsub.f32 %v931, %v932
            %v934 = vmax.f32 %v933, 0.0
            %v935 = vadd.f32 %v934, 1e-05
            %v936 = vrsqrt.pop %v935
            %v937 = vmul.f32 %v936, %v935
            %v938 = vmul.f32 %v937, %v936
            %v939 = vmul.f32 0.5, %v938
            %v940 = vsub.f32 1.5, %v939
            %v941 = vmul.f32 %v936, %v940
            %vm942 = vweird.f32 %v935
            %vm943 = vweird.f32 %v936
            %vm944 = vmor %vm942, %vm943
            %v945 = vsel %vm944, %v936, %v941
            %v946 = vld [vmem:[%s9] sm:$0x1]
            %v947 = vmul.f32 %v946, %v945
            %vm948 = vcmask 253952
            %949 = vst.msk [vmem:[#allocation5] sm:$0x1] %vm948, %v947
            %v950 = vld [vmem:[%s10] sm:$0x1]
            %v951 = vmul.f32 %v929, %v946
            %v952 = vmul.f32 %v951, %v945
            %v953 = vsub.f32 %v950, %v952
            %954 = vst.msk [vmem:[#allocation5 + $0x1] sm:$0x1] %vm948, %v953
          $region88: #{conv_module_forward.1} parent=83 // pred_fallthru
            _
          %s955 = smul.u32 %s461, 16
          %s956 = scalar_lea.vmem [#allocation3], %s955
          %v957 = vld [vmem:[%s956] sm:$0xff]
          %v958 = vld [vmem:[%s956 + $0x8] sm:$0xff]
          %v959 = vld [vmem:[%s956 + $0x10] sm:$0xff]
          %v960 = vld [vmem:[%s956 + $0x18] sm:$0xff]
          %v961 = vld [vmem:[#allocation5] sm:$0x1]
          %v962 = vld [vmem:[#allocation5 + $0x1] sm:$0x1]
          %v963 = vld [vmem:[%s11] sm:$0xf]
          %v964 = vld [vmem:[%s11 + $0x4] sm:$0xf]
          %v965 = vld [vmem:[%s11 + $0x8] sm:$0xf]
          %v966 = vld [vmem:[%s11 + $0xc] sm:$0xf]
          %v967 = vld [vmem:[%s12] sm:$0x1]
          %v968 = vperm.slane %v961, 0
          %v969 = vmul.f32 %v957, %v968
          %v970 = vmul.f32 %v958, %v968
          %v971 = vmul.f32 %v959, %v968
          %v972 = vmul.f32 %v960, %v968
          %v973 = vperm.slane %v962, 0
          %v974 = vadd.f32 %v969, %v973
          %v975 = vadd.f32 %v970, %v973
          %v976 = vadd.f32 %v971, %v973
          %v977 = vadd.f32 %v972, %v973
          %v978 = vxor.u32 %v974, 2147483648
          %v979 = vxor.u32 %v975, 2147483648
          %v980 = vxor.u32 %v976, 2147483648
          %v981 = vxor.u32 %v977, 2147483648
          %v982 = vmul.f32 %v978, 1.442695
          %v983 = vpow.pop %v982
          %v984 = vmul.f32 %v979, 1.442695
          %v985 = vpow.pop %v984
          %v986 = vmul.f32 %v980, 1.442695
          %v987 = vpow.pop %v986
          %v988 = vmul.f32 %v981, 1.442695
          %v989 = vpow.pop %v988
          %v990 = vadd.f32 %v983, 1.0
          %v991 = vadd.f32 %v985, 1.0
          %v992 = vadd.f32 %v987, 1.0
          %v993 = vadd.f32 %v989, 1.0
          %v994 = vrcp.pop %v990
          %v995 = vmul.f32 %v990, %v994
          %v996 = vsub.f32 1.0, %v995
          %v997 = vmul.f32 %v994, %v996
          %v998 = vadd.f32 %v994, %v997
          %vm999 = vweird.f32 %v990
          %vm1000 = vweird.f32 %v994
          %vm1001 = vmor %vm999, %vm1000
          %v1002 = vsel %vm1001, %v994, %v998
          %v1003 = vand.u32 2147483647, %v990
          %vm1004 = vcmp.eq.f32.partialorder %v1003, 8.507059e+37
          %v1005 = vand.u32 %v990, 2147483648
          %v1006 = vor.u32 1.1754944e-38, %v1005
          %v1007 = vsel %vm1004, %v1006, %v1002
          %v1008 = vmul.f32 1.0, %v1007
          %v1009 = vrcp.pop %v991
          %v1010 = vmul.f32 %v991, %v1009
          %v1011 = vsub.f32 1.0, %v1010
          %v1012 = vmul.f32 %v1009, %v1011
          %v1013 = vadd.f32 %v1009, %v1012
          %vm1014 = vweird.f32 %v991
          %vm1015 = vweird.f32 %v1009
          %vm1016 = vmor %vm1014, %vm1015
          %v1017 = vsel %vm1016, %v1009, %v1013
          %v1018 = vand.u32 2147483647, %v991
          %vm1019 = vcmp.eq.f32.partialorder %v1018, 8.507059e+37
          %v1020 = vand.u32 %v991, 2147483648
          %v1021 = vor.u32 1.1754944e-38, %v1020
          %v1022 = vsel %vm1019, %v1021, %v1017
          %v1023 = vmul.f32 1.0, %v1022
          %v1024 = vrcp.pop %v992
          %v1025 = vmul.f32 %v992, %v1024
          %v1026 = vsub.f32 1.0, %v1025
          %v1027 = vmul.f32 %v1024, %v1026
          %v1028 = vadd.f32 %v1024, %v1027
          %vm1029 = vweird.f32 %v992
          %vm1030 = vweird.f32 %v1024
          %vm1031 = vmor %vm1029, %vm1030
          %v1032 = vsel %vm1031, %v1024, %v1028
          %v1033 = vand.u32 2147483647, %v992
          %vm1034 = vcmp.eq.f32.partialorder %v1033, 8.507059e+37
          %v1035 = vand.u32 %v992, 2147483648
          %v1036 = vor.u32 1.1754944e-38, %v1035
          %v1037 = vsel %vm1034, %v1036, %v1032
          %v1038 = vmul.f32 1.0, %v1037
          %v1039 = vrcp.pop %v993
          %v1040 = vmul.f32 %v993, %v1039
          %v1041 = vsub.f32 1.0, %v1040
          %v1042 = vmul.f32 %v1039, %v1041
          %v1043 = vadd.f32 %v1039, %v1042
          %vm1044 = vweird.f32 %v993
          %vm1045 = vweird.f32 %v1039
          %vm1046 = vmor %vm1044, %vm1045
          %v1047 = vsel %vm1046, %v1039, %v1043
          %v1048 = vand.u32 2147483647, %v993
          %vm1049 = vcmp.eq.f32.partialorder %v1048, 8.507059e+37
          %v1050 = vand.u32 %v993, 2147483648
          %v1051 = vor.u32 1.1754944e-38, %v1050
          %v1052 = vsel %vm1049, %v1051, %v1047
          %v1053 = vmul.f32 1.0, %v1052
          %v1054 = vmul.f32 %v974, %v1008
          %v1055 = vmul.f32 %v975, %v1023
          %v1056 = vmul.f32 %v976, %v1038
          %v1057 = vmul.f32 %v977, %v1053
          %v1058 = vpack.c.bf16 %v1055, %v1054
          %v1059 = vpack.c.bf16 %v1057, %v1056
          %v1061 = vperm.slane %v967, 0
          %v1067 = vunpack.c.l.b16 %v963
          %v1068 = vunpack.c.l.b16 %v964
          %v1069 = vunpack.c.l.b16 %v965
          %v1070 = vunpack.c.l.b16 %v966
          %v1071 = vpack.c.b16 %v1068, %v1067
          %v1072 = vpack.c.b16 %v1070, %v1069
          %vm1075 = vcmask 261120
          %v1077 = vsel %vm1075, %v1058, 0
          %v1080 = vsel %vm1075, %v1059, 0
          %1082 = vmatpush.bf16.msra.mxu0 0
          %1083 = vmatpush.bf16.msra.mxu0 0
          %1084 = vmatpush.bf16.msra.mxu0 0
          %1085 = vmatpush.bf16.msra.mxu0 0
          %1086 = vmatpush.bf16.msra.mxu0 0
          %1087 = vmatpush.bf16.msra.mxu0 0
          %1088 = vmatpush.bf16.msra.mxu0 %v1072
          %1089 = vmatpush.bf16.msra.mxu0 %v1071
          %1090 = vmatmul.bf16.gmra.mxu0 %v1077
          %v1091 = vpop.f32.mrf.mxu0
          %v1092 = vadd.f32 %v1061, %v1091
          %v1093 = vpop.f32.mrf.mxu0
          %v1094 = vadd.f32 %v1061, %v1093
          %1095 = vmatmul.bf16.gmra.mxu0 %v1080
          %v1096 = vpop.f32.mrf.mxu0
          %v1097 = vadd.f32 %v1061, %v1096
          %v1098 = vpop.f32.mrf.mxu0
          %v1099 = vadd.f32 %v1061, %v1098
          %1100 = vdwg.mxu0
          %v1101 = vld [vmem:[%s456] sm:$0xff]
          %v1102 = vld [vmem:[%s456 + $0x8] sm:$0xff]
          %v1103 = vld [vmem:[%s456 + $0x10] sm:$0xff]
          %v1104 = vld [vmem:[%s456 + $0x18] sm:$0xff]
          %v1105 = vadd.f32 %v1101, %v1092
          %v1106 = vadd.f32 %v1102, %v1094
          %v1107 = vadd.f32 %v1103, %v1097
          %v1108 = vadd.f32 %v1104, %v1099
          %1109 = vst.msk [vmem:[%s450] sm:$0xff] %vm1075, %v1105
          %1110 = vst.msk [vmem:[%s450 + $0x8] sm:$0xff] %vm1075, %v1106
          %1111 = vst.msk [vmem:[%s450 + $0x10] sm:$0xff] %vm1075, %v1107
          %1112 = vst.msk [vmem:[%s450 + $0x18] sm:$0xff] %vm1075, %v1108
        $region84: #{conv_module_forward.1} parent=71 // pred_fallthru
          _
        %s1113 = sand.u32 %s327, 1
        %s1114 = scalar_lea.sflag [#allocation7], %s1113
        %s1115 = sand.u32 %s327, 1
        %s1116 = smul.addr %s1115, 32
        %s1117 = scalar_lea.vmem [#allocation6], %s1116
        // Predicated region
        $region89: #{conv_module_forward.1} parent=71 // pred_check
          %p1118 = pneg %p337
        $region90: #{conv_module_forward.1} parent=71 // pred_check_branch
          %1120 = sbr.rel (%p1118) target = $region92
        $region91: #{conv_module_forward.1} parent=71 // pred_region
          %s1121 = smul.u32 %s32, %s31
          %s1122 = smul.u32 2, %s1121
          %1124 = vsyncadd %s1114, 0
          %s1125 = smul.addr %s1122, 2
          %s1126 = smul.addr %s1125, 8
          %s1127 = scalar_lea.hbm %s13, %s1126
          %s1128 = sshll.u32 %s1117, 4
          %s1129 = int_to_ptr.vmem [resolvable:$true] %s1128
          %s1130 = sshll.u32 %s1127, 4
          %s1131 = int_to_ptr.hbm [resolvable:$true] %s1130
          %1136 = dma.vmem_to_hbm [thread:$0]  %s1129, 512, %s1131, %s1114, 128, 128, 8
        $region92: #{conv_module_forward.1} parent=71 // pred_fallthru
          _
      $region72: #{conv_module_forward.1} parent=5 // pred_fallthru
        _
      %p1137 = scmp.le.s32.totalorder 2, %s22
      // Predicated region
      $region93: #{conv_module_forward.1} parent=5 // pred_check
        %p1138 = pneg %p1137
      $region94: #{conv_module_forward.1} parent=5 // pred_check_branch
        %1140 = sbr.rel (%p1138) target = $region96
      $region95: #{conv_module_forward.1} parent=5 // pred_region
        %s1141 = ssub.s32 %s22, 2
        // Predicated region
        $region97: #{conv_module_forward.1} parent=95 // pred_check
          %p1142 = pneg %p343
        $region98: #{conv_module_forward.1} parent=95 // pred_check_branch
          %1144 = sbr.rel (%p1142) target = $region100
        $region99: #{conv_module_forward.1} parent=95 // pred_region
          %s1145 = sand.u32 %s328, 1
          %s1146 = scalar_lea.sflag [#allocation7], %s1145
          %s1147 = sand.u32 %s328, 1
          %s1148 = smul.addr %s1147, 32
          %s1149 = scalar_lea.vmem [#allocation6], %s1148
          %1151 = dma.done %s1146, 512
        $region100: #{conv_module_forward.1} parent=95 // pred_fallthru
          _
      $region96: #{conv_module_forward.1} parent=5 // pred_fallthru
        _
    $region6: #{conv_module_forward.1} parent=1 // loop_footer
      %s26 = sadd.s32 1, %s22
    $region7: #{conv_module_forward.1} parent=1 // loop_footer_branch
      %21 = sbr.rel target = $region3
    $region8: #{conv_module_forward.1} parent=1 // loop_exit
      _
    %1152 = vsyncpa [#allocation7], 1
    %s1153 = scalar_lea.sflag [#allocation7], 1
    %1154 = vsyncpa %s1153, 1

</llo_original>
